<compile_context>
chip_gen: v5e
topology: v5e:2x2
jax: 0.10.0
libtpu: 0.0.40
codegen_flags: <defaults>
</compile_context>

<pallas_src>
import functools
import math

import jax
import jax.numpy as jnp
from jax.experimental import pallas as pl
from jax.experimental.pallas import tpu as pltpu

EMBEDDING_DIM = 128          # fixed by the module
FFN_DIM = EMBEDDING_DIM * 4  # linear_2 output
VOCAB_SIZE = 1000            # small synthetic vocab
MAX_SEQ_LENGTH = 512


# ---------------------------------------------------------------------------
# bf16_3x matmul helpers: a ~= a_hi + a_lo with both parts bf16; the product
# a@b is recovered to ~f32 accuracy from 3 bf16 MXU matmuls (f32 accumulate).
# ---------------------------------------------------------------------------
def _split_bf16(a):
    hi = a.astype(jnp.bfloat16)
    lo = (a - hi.astype(jnp.float32)).astype(jnp.bfloat16)
    return hi, lo


def _contract_3x(contract, a, b):
    a_hi, a_lo = _split_bf16(a)
    b_hi, b_lo = _split_bf16(b)
    return (contract(a_hi, b_hi)
            + contract(a_hi, b_lo)
            + contract(a_lo, b_hi))


def _mm(a, b):
    return jnp.dot(a, b, preferred_element_type=jnp.float32)


def _qk(a, b):  # scores: contract last axes directly, no explicit k.T
    return jnp.einsum("bqd,bkd->bqk", a, b, preferred_element_type=jnp.float32)


def _pv(a, b):
    return jnp.einsum("bqk,bkd->bqd", a, b, preferred_element_type=jnp.float32)


# ---------------------------------------------------------------------------
# Kernel: one (block_b, S, D) batch block per grid step.
# ---------------------------------------------------------------------------
def transformer_layer_kernel(
    emb_ref,          # (Bt, S, D)  token + positional embeddings
    wqkv_ref,         # (D, 3D)     fused [wq | wk | wv]
    w1_ref, b1_ref,   # (D, D), (1, D)
    w2_ref, b2_ref,   # (D, 4D), (1, 4D)
    w3_ref, b3_ref,   # (4D, D), (1, D)
    out_ref,          # (Bt, S, D)
    *, s_valid,       # static: number of real (unpadded) sequence positions
):
    bt, s, d = emb_ref.shape
    x3 = emb_ref[...]                       # (Bt, S, D) float32
    x = x3.reshape(bt * s, d)               # (M, D), layout no-op (S % 8 == 0)

    # ---- fused QKV projection: one logical MXU push, N = 3D ----
    qkv = _contract_3x(_mm, x, wqkv_ref[...])                  # (M, 3D)
    inv_sqrt_d = jnp.float32(1.0 / math.sqrt(d))
    q = (qkv[:, 0 * d:1 * d] * inv_sqrt_d).reshape(bt, s, d)   # scale folded into q
    k = qkv[:, 1 * d:2 * d].reshape(bt, s, d)
    v = qkv[:, 2 * d:3 * d].reshape(bt, s, d)

    # ---- attention (token mask is dead code in the reference module) ----
    scores = _contract_3x(_qk, q, k)                            # (Bt, S, S)
    if s_valid != s:
        # mask padded key positions so sequence padding never changes results
        key_pos = jax.lax.broadcasted_iota(jnp.int32, (bt, s, s), 2)
        scores = jnp.where(key_pos < s_valid, scores, jnp.float32(-1e30))
    m = jnp.max(scores, axis=-1, keepdims=True)
    e = jnp.exp(scores - m)
    denom = jnp.sum(e, axis=-1, keepdims=True)
    probs = e * pl.reciprocal(denom, approx=True)               # EUP slot, ~2e-4 rel
    attn = _contract_3x(_pv, probs, v)                          # (Bt, S, D)
    attn2 = attn.reshape(bt * s, d)

    # ---- linear_1 + residual ----
    lin1 = _contract_3x(_mm, attn2, w1_ref[...]) + b1_ref[...]
    res1 = lin1 + x

    # ---- LayerNormalization 1: (x - mean) / unbiased_variance ----
    mean1 = jnp.mean(res1, axis=-1, keepdims=True)
    cen1 = res1 - mean1
    var1 = jnp.sum(cen1 * cen1, axis=-1, keepdims=True) * jnp.float32(1.0 / (d - 1))
    ln1 = cen1 * pl.reciprocal(var1, approx=False)              # keep exact

    # ---- FFN: linear_2 -> ReLU -> linear_3 + residual ----
    lin2 = _contract_3x(_mm, ln1, w2_ref[...]) + b2_ref[...]
    relu = jnp.maximum(lin2, 0.0)
    lin3 = _contract_3x(_mm, relu, w3_ref[...]) + b3_ref[...]
    res2 = lin3 + ln1

    # ---- LayerNormalization 2 ----
    mean2 = jnp.mean(res2, axis=-1, keepdims=True)
    cen2 = res2 - mean2
    var2 = jnp.sum(cen2 * cen2, axis=-1, keepdims=True) * jnp.float32(1.0 / (d - 1))
    ln2 = cen2 * pl.reciprocal(var2, approx=False)              # keep exact

    out_ref[...] = ln2.reshape(bt, s, d).astype(out_ref.dtype)


# ---------------------------------------------------------------------------
# Wrapper
# ---------------------------------------------------------------------------
def transformer_layer(token_embeddings, params, *, block_b=None, target_rows=1024):
    """token_embeddings: (B, S, D) float32 (positional embedding already added)."""
    B, S, D = token_embeddings.shape
    F = params["w2"].shape[1]

    # Pad S to a multiple of 8 so the (Bt,S,D)<->(Bt*S,D) reshapes are layout
    # no-ops.  Edge replication keeps padded rows finite (no 0-variance NaN);
    # padded keys are masked inside the kernel.
    Sp = ((S + 7) // 8) * 8
    if Sp != S:
        token_embeddings = jnp.pad(
            token_embeddings, ((0, 0), (0, Sp - S), (0, 0)), mode="edge")

    # Block enough batch elements per grid step to fill the matmul M dim
    # (target M = block_b * Sp ~ target_rows, well under the 32 MiB scoped
    # VMEM default), but keep >= 2 grid steps when B allows it so the
    # "parallel" axis shards across both TensorCores on v7x.
    if block_b is None:
        block_b = max(1, min(B, target_rows // Sp))
        if B > 1 and pl.cdiv(B, block_b) < 2:
            block_b = max(1, (B + 1) // 2)
    nb = pl.cdiv(B, block_b)
    Bp = nb * block_b
    if Bp != B:
        token_embeddings = jnp.pad(
            token_embeddings, ((0, Bp - B), (0, 0), (0, 0)), mode="edge")

    wqkv = params["wqkv"]  # fused once at param-init time (hoisted)

    full2d = lambda b: (0, 0)
    grid_spec = pltpu.PrefetchScalarGridSpec(
        num_scalar_prefetch=0,
        grid=(nb,),
        in_specs=[
            pl.BlockSpec((block_b, Sp, D), lambda b: (b, 0, 0)),  # embeddings
            pl.BlockSpec((D, 3 * D), full2d),                     # wqkv (fused)
            pl.BlockSpec((D, D), full2d),                         # w1
            pl.BlockSpec((1, D), full2d),                         # b1
            pl.BlockSpec((D, F), full2d),                         # w2
            pl.BlockSpec((1, F), full2d),                         # b2
            pl.BlockSpec((F, D), full2d),                         # w3
            pl.BlockSpec((1, D), full2d),                         # b3
        ],
        out_specs=pl.BlockSpec((block_b, Sp, D), lambda b: (b, 0, 0)),
    )

    kernel = functools.partial(transformer_layer_kernel, s_valid=S)

    out = pl.pallas_call(
        kernel,
        out_shape=jax.ShapeDtypeStruct((Bp, Sp, D), jnp.float32),
        grid_spec=grid_spec,
        compiler_params=pltpu.CompilerParams(
            dimension_semantics=("parallel",),   # megacore split on v7x (nb >= 2)
        ),
    )(
        token_embeddings, wqkv,
        params["w1"], params["b1"],
        params["w2"], params["b2"],
        params["w3"], params["b3"],
    )
    return out[:B, :S]


def model_forward(x_ids, token_attention_masks, params):
    """Full Model.forward.  Embedding gathers are glue (plain JAX); the
    attention + FFN + layer-norm hot path runs in the Pallas kernel.

    NOTE: token_attention_masks is accepted for signature parity but is dead
    code in the reference module (mask is computed then discarded)."""
    del token_attention_masks  # faithfully unused, as in the PyTorch forward
    B, S = x_ids.shape
    tok_emb = params["embedding"][x_ids]                       # (B, S, D)
    pos_emb = params["pos_embedding"][jnp.arange(S)][None]     # (1, S, D)
    embeddings = tok_emb + pos_emb
    return transformer_layer(embeddings, params)


def _reference_forward(x_ids, params):
    """Pure-JAX reference for a correctness check."""
    B, S = x_ids.shape
    D = EMBEDDING_DIM
    x = params["embedding"][x_ids] + params["pos_embedding"][jnp.arange(S)][None]
    q = x @ params["wq"]
    k = x @ params["wk"]
    v = x @ params["wv"]
    scores = jnp.einsum("bqd,bkd->bqk", q, k) / math.sqrt(D)
    probs = jax.nn.softmax(scores, axis=-1)
    attn = jnp.einsum("bqk,bkd->bqd", probs, v)
    lin1 = attn @ params["w1"] + params["b1"]
    res1 = lin1 + x

    def ln(t):
        mean = jnp.mean(t, axis=-1, keepdims=True)
        var = jnp.sum((t - mean) ** 2, axis=-1, keepdims=True) / (D - 1)
        return (t - mean) / var

    ln1_o = ln(res1)
    lin2 = jnp.maximum(ln1_o @ params["w2"] + params["b2"], 0.0)
    lin3 = lin2 @ params["w3"] + params["b3"]
    return ln(lin3 + ln1_o)


def init_params(key):
    D, F = EMBEDDING_DIM, FFN_DIM
    keys = jax.random.split(key, 12)
    scale = 1.0 / math.sqrt(D)
    params = {
        "embedding": jax.random.normal(keys[0], (VOCAB_SIZE, D), jnp.float32) * 0.02,
        "pos_embedding": jax.random.normal(keys[1], (MAX_SEQ_LENGTH, D), jnp.float32) * 0.02,
        # Attention weights: torch.rand -> uniform [0, 1)
        "wq": jax.random.uniform(keys[2], (D, D), jnp.float32),
        "wk": jax.random.uniform(keys[3], (D, D), jnp.float32),
        "wv": jax.random.uniform(keys[4], (D, D), jnp.float32),
        # Linear layers (stored as (in, out)); biases kept 2D (1, out) for VMEM
        "w1": jax.random.uniform(keys[5], (D, D), jnp.float32, -scale, scale),
        "b1": jax.random.uniform(keys[6], (1, D), jnp.float32, -scale, scale),
        "w2": jax.random.uniform(keys[7], (D, F), jnp.float32, -scale, scale),
        "b2": jax.random.uniform(keys[8], (1, F), jnp.float32, -scale, scale),
        "w3": jax.random.uniform(keys[9], (F, D), jnp.float32, -1.0 / math.sqrt(F), 1.0 / math.sqrt(F)),
        "b3": jax.random.uniform(keys[10], (1, D), jnp.float32, -1.0 / math.sqrt(F), 1.0 / math.sqrt(F)),
    }
    # Hoisted QKV fusion: one (D, 3D) matrix built once, not per forward call.
    params["wqkv"] = jnp.concatenate([params["wq"], params["wk"], params["wv"]], axis=1)
    return params


if __name__ == "__main__":
    key = jax.random.PRNGKey(0)
    k_ids, k_ids2, k_params = jax.random.split(key, 3)
    params = init_params(k_params)

    fwd = jax.jit(model_forward)

    # --- main check: B=2, S=8 (multiple of 8 path) ---
    B, S = 2, 8
    x_ids = jax.random.randint(k_ids, (B, S), 0, VOCAB_SIZE, dtype=jnp.int32)
    token_attention_masks = jnp.array(
        [[1] * S, [1] * (S - 2) + [0, 0]], dtype=jnp.int32)

    out = jax.block_until_ready(fwd(x_ids, token_attention_masks, params))
    ref = _reference_forward(x_ids, params)
    assert out.shape == (B, S, EMBEDDING_DIM)
    assert jnp.allclose(out, ref, rtol=1e-3, atol=1e-3), "mismatch vs JAX reference"

    # --- secondary check: S not a multiple of 8 (padding + key masking path) ---
    B2, S2 = 2, 13
    x_ids2 = jax.random.randint(k_ids2, (B2, S2), 0, VOCAB_SIZE, dtype=jnp.int32)
    masks2 = jnp.ones((B2, S2), dtype=jnp.int32)
    out2 = jax.block_until_ready(fwd(x_ids2, masks2, params))
    ref2 = _reference_forward(x_ids2, params)
    assert out2.shape == (B2, S2, EMBEDDING_DIM)
    assert jnp.allclose(out2, ref2, rtol=1e-3, atol=1e-3), "mismatch (padded S) vs JAX reference"

    print("KERNEL_OK")
</pallas_src>

<mosaic_0001>
module attributes {stable_mosaic.version = 11 : i64} {
  func.func @transformer_layer_kernel(%arg0: i32, %arg1: memref<1x8x128xf32, #tpu.memory_space<vmem>>, %arg2: memref<128x384xf32, #tpu.memory_space<vmem>>, %arg3: memref<128x128xf32, #tpu.memory_space<vmem>>, %arg4: memref<1x128xf32, #tpu.memory_space<vmem>>, %arg5: memref<128x512xf32, #tpu.memory_space<vmem>>, %arg6: memref<1x512xf32, #tpu.memory_space<vmem>>, %arg7: memref<512x128xf32, #tpu.memory_space<vmem>>, %arg8: memref<1x128xf32, #tpu.memory_space<vmem>>, %arg9: memref<1x8x128xf32, #tpu.memory_space<vmem>>) attributes {dimension_semantics = [#tpu.dimension_semantics<parallel>], iteration_bounds = array<i64: 2>, scalar_prefetch = 0 : i64, scratch_operands = 0 : i64, tpu.core_type = #tpu.core_type<tc>, window_params = [{transform_indices = @transform_0, window_bounds = array<i64: 1, 8, 128>}, {pipeline_mode = #tpu.pipeline_mode<synchronous>, transform_indices = @transform_1, window_bounds = array<i64: 128, 384>}, {pipeline_mode = #tpu.pipeline_mode<synchronous>, transform_indices = @transform_2, window_bounds = array<i64: 128, 128>}, {pipeline_mode = #tpu.pipeline_mode<synchronous>, transform_indices = @transform_3, window_bounds = array<i64: 1, 128>}, {pipeline_mode = #tpu.pipeline_mode<synchronous>, transform_indices = @transform_4, window_bounds = array<i64: 128, 512>}, {pipeline_mode = #tpu.pipeline_mode<synchronous>, transform_indices = @transform_5, window_bounds = array<i64: 1, 512>}, {pipeline_mode = #tpu.pipeline_mode<synchronous>, transform_indices = @transform_6, window_bounds = array<i64: 512, 128>}, {pipeline_mode = #tpu.pipeline_mode<synchronous>, transform_indices = @transform_7, window_bounds = array<i64: 1, 128>}, {transform_indices = @transform_8, window_bounds = array<i64: 1, 8, 128>}]} {
    %c0 = arith.constant 0 : index
    %c0_0 = arith.constant 0 : index
    %c0_1 = arith.constant 0 : index
    %0 = vector.load %arg1[%c0, %c0_0, %c0_1] : memref<1x8x128xf32, #tpu.memory_space<vmem>>, vector<1x8x128xf32>
    %1 = vector.shape_cast %0 : vector<1x8x128xf32> to vector<8x128xf32>
    %c0_2 = arith.constant 0 : index
    %c0_3 = arith.constant 0 : index
    %2 = vector.load %arg2[%c0_2, %c0_3] : memref<128x384xf32, #tpu.memory_space<vmem>>, vector<128x384xf32>
    %3 = arith.truncf %1 : vector<8x128xf32> to vector<8x128xbf16>
    %4 = arith.extf %3 : vector<8x128xbf16> to vector<8x128xf32>
    %5 = arith.subf %1, %4 : vector<8x128xf32>
    %6 = arith.truncf %5 : vector<8x128xf32> to vector<8x128xbf16>
    %7 = arith.truncf %2 : vector<128x384xf32> to vector<128x384xbf16>
    %8 = arith.extf %7 : vector<128x384xbf16> to vector<128x384xf32>
    %9 = arith.subf %2, %8 : vector<128x384xf32>
    %10 = arith.truncf %9 : vector<128x384xf32> to vector<128x384xbf16>
    %cst = arith.constant dense<0.000000e+00> : vector<8x384xf32>
    %11 = tpu.matmul %3, %7, %cst {dimension_numbers = #tpu.dot_dimension_numbers<[1], [0], [0], [1], [0, 0, 1, 1], [], []>} : vector<8x128xbf16>, vector<128x384xbf16>, vector<8x384xf32> -> vector<8x384xf32>
    %cst_4 = arith.constant dense<0.000000e+00> : vector<8x384xf32>
    %12 = tpu.matmul %3, %10, %cst_4 {dimension_numbers = #tpu.dot_dimension_numbers<[1], [0], [0], [1], [0, 0, 1, 1], [], []>} : vector<8x128xbf16>, vector<128x384xbf16>, vector<8x384xf32> -> vector<8x384xf32>
    %13 = arith.addf %11, %12 : vector<8x384xf32>
    %cst_5 = arith.constant dense<0.000000e+00> : vector<8x384xf32>
    %14 = tpu.matmul %6, %7, %cst_5 {dimension_numbers = #tpu.dot_dimension_numbers<[1], [0], [0], [1], [0, 0, 1, 1], [], []>} : vector<8x128xbf16>, vector<128x384xbf16>, vector<8x384xf32> -> vector<8x384xf32>
    %15 = arith.addf %13, %14 : vector<8x384xf32>
    %16 = vector.extract_strided_slice %15 {offsets = [0, 0], sizes = [8, 128], strides = [1, 1]} : vector<8x384xf32> to vector<8x128xf32>
    %cst_6 = arith.constant 0.0883883461 : f32
    %17 = vector.broadcast %cst_6 : f32 to vector<8x128xf32>
    %18 = arith.mulf %16, %17 : vector<8x128xf32>
    %19 = vector.shape_cast %18 : vector<8x128xf32> to vector<1x8x128xf32>
    %20 = vector.extract_strided_slice %15 {offsets = [0, 128], sizes = [8, 128], strides = [1, 1]} : vector<8x384xf32> to vector<8x128xf32>
    %21 = vector.shape_cast %20 : vector<8x128xf32> to vector<1x8x128xf32>
    %22 = vector.extract_strided_slice %15 {offsets = [0, 256], sizes = [8, 128], strides = [1, 1]} : vector<8x384xf32> to vector<8x128xf32>
    %23 = vector.shape_cast %22 : vector<8x128xf32> to vector<1x8x128xf32>
    %24 = arith.truncf %19 : vector<1x8x128xf32> to vector<1x8x128xbf16>
    %25 = arith.extf %24 : vector<1x8x128xbf16> to vector<1x8x128xf32>
    %26 = arith.subf %19, %25 : vector<1x8x128xf32>
    %27 = arith.truncf %26 : vector<1x8x128xf32> to vector<1x8x128xbf16>
    %28 = arith.truncf %21 : vector<1x8x128xf32> to vector<1x8x128xbf16>
    %29 = arith.extf %28 : vector<1x8x128xbf16> to vector<1x8x128xf32>
    %30 = arith.subf %21, %29 : vector<1x8x128xf32>
    %31 = arith.truncf %30 : vector<1x8x128xf32> to vector<1x8x128xbf16>
    "tpu.trace_start"() <{level = 10 : i32, message = "bqd,bkd->bqk"}> : () -> ()
    %cst_7 = arith.constant dense<0.000000e+00> : vector<1x8x8xf32>
    %32 = tpu.matmul %24, %28, %cst_7 {dimension_numbers = #tpu.dot_dimension_numbers<[2], [2], [1], [1], [0, 0, 0, 1, 1, 1], [0], [0]>} : vector<1x8x128xbf16>, vector<1x8x128xbf16>, vector<1x8x8xf32> -> vector<1x8x8xf32>
    %cst_8 = arith.constant dense<0.000000e+00> : vector<1x8x8xf32>
    %33 = tpu.matmul %24, %31, %cst_8 {dimension_numbers = #tpu.dot_dimension_numbers<[2], [2], [1], [1], [0, 0, 0, 1, 1, 1], [0], [0]>} : vector<1x8x128xbf16>, vector<1x8x128xbf16>, vector<1x8x8xf32> -> vector<1x8x8xf32>
    "tpu.trace_stop"() : () -> ()
    %34 = arith.addf %32, %33 : vector<1x8x8xf32>
    "tpu.trace_start"() <{level = 10 : i32, message = "bqd,bkd->bqk"}> : () -> ()
    %cst_9 = arith.constant dense<0.000000e+00> : vector<1x8x8xf32>
    %35 = tpu.matmul %27, %28, %cst_9 {dimension_numbers = #tpu.dot_dimension_numbers<[2], [2], [1], [1], [0, 0, 0, 1, 1, 1], [0], [0]>} : vector<1x8x128xbf16>, vector<1x8x128xbf16>, vector<1x8x8xf32> -> vector<1x8x8xf32>
    "tpu.trace_stop"() : () -> ()
    %36 = arith.addf %34, %35 : vector<1x8x8xf32>
    %cst_10 = arith.constant dense<0xFF800000> : vector<1x8xf32>
    %37 = vector.multi_reduction <maximumf>, %36, %cst_10 [2] : vector<1x8x8xf32> to vector<1x8xf32>
    %38 = vector.shape_cast %37 : vector<1x8xf32> to vector<1x8x1xf32>
    %39 = vector.broadcast %38 : vector<1x8x1xf32> to vector<1x8x8xf32>
    %40 = arith.subf %36, %39 : vector<1x8x8xf32>
    %41 = math.exp %40 : vector<1x8x8xf32>
    %cst_11 = arith.constant dense<0.000000e+00> : vector<1x8xf32>
    %42 = vector.multi_reduction <add>, %41, %cst_11 [2] : vector<1x8x8xf32> to vector<1x8xf32>
    %43 = vector.shape_cast %42 : vector<1x8xf32> to vector<1x8x1xf32>
    %44 = tpu.reciprocal %43 {approx = true} : vector<1x8x1xf32> -> vector<1x8x1xf32>
    %45 = vector.broadcast %44 : vector<1x8x1xf32> to vector<1x8x8xf32>
    %46 = arith.mulf %41, %45 : vector<1x8x8xf32>
    %47 = arith.truncf %46 : vector<1x8x8xf32> to vector<1x8x8xbf16>
    %48 = arith.extf %47 : vector<1x8x8xbf16> to vector<1x8x8xf32>
    %49 = arith.subf %46, %48 : vector<1x8x8xf32>
    %50 = arith.truncf %49 : vector<1x8x8xf32> to vector<1x8x8xbf16>
    %51 = arith.truncf %23 : vector<1x8x128xf32> to vector<1x8x128xbf16>
    %52 = arith.extf %51 : vector<1x8x128xbf16> to vector<1x8x128xf32>
    %53 = arith.subf %23, %52 : vector<1x8x128xf32>
    %54 = arith.truncf %53 : vector<1x8x128xf32> to vector<1x8x128xbf16>
    "tpu.trace_start"() <{level = 10 : i32, message = "bqk,bkd->bqd"}> : () -> ()
    %cst_12 = arith.constant dense<0.000000e+00> : vector<1x8x128xf32>
    %55 = tpu.matmul %47, %51, %cst_12 {dimension_numbers = #tpu.dot_dimension_numbers<[2], [1], [1], [2], [0, 0, 0, 1, 1, 2], [0], [0]>} : vector<1x8x8xbf16>, vector<1x8x128xbf16>, vector<1x8x128xf32> -> vector<1x8x128xf32>
    %cst_13 = arith.constant dense<0.000000e+00> : vector<1x8x128xf32>
    %56 = tpu.matmul %47, %54, %cst_13 {dimension_numbers = #tpu.dot_dimension_numbers<[2], [1], [1], [2], [0, 0, 0, 1, 1, 2], [0], [0]>} : vector<1x8x8xbf16>, vector<1x8x128xbf16>, vector<1x8x128xf32> -> vector<1x8x128xf32>
    "tpu.trace_stop"() : () -> ()
    %57 = arith.addf %55, %56 : vector<1x8x128xf32>
    "tpu.trace_start"() <{level = 10 : i32, message = "bqk,bkd->bqd"}> : () -> ()
    %cst_14 = arith.constant dense<0.000000e+00> : vector<1x8x128xf32>
    %58 = tpu.matmul %50, %51, %cst_14 {dimension_numbers = #tpu.dot_dimension_numbers<[2], [1], [1], [2], [0, 0, 0, 1, 1, 2], [0], [0]>} : vector<1x8x8xbf16>, vector<1x8x128xbf16>, vector<1x8x128xf32> -> vector<1x8x128xf32>
    "tpu.trace_stop"() : () -> ()
    %59 = arith.addf %57, %58 : vector<1x8x128xf32>
    %60 = vector.shape_cast %59 : vector<1x8x128xf32> to vector<8x128xf32>
    %c0_15 = arith.constant 0 : index
    %c0_16 = arith.constant 0 : index
    %61 = vector.load %arg3[%c0_15, %c0_16] : memref<128x128xf32, #tpu.memory_space<vmem>>, vector<128x128xf32>
    %62 = arith.truncf %60 : vector<8x128xf32> to vector<8x128xbf16>
    %63 = arith.extf %62 : vector<8x128xbf16> to vector<8x128xf32>
    %64 = arith.subf %60, %63 : vector<8x128xf32>
    %65 = arith.truncf %64 : vector<8x128xf32> to vector<8x128xbf16>
    %66 = arith.truncf %61 : vector<128x128xf32> to vector<128x128xbf16>
    %67 = arith.extf %66 : vector<128x128xbf16> to vector<128x128xf32>
    %68 = arith.subf %61, %67 : vector<128x128xf32>
    %69 = arith.truncf %68 : vector<128x128xf32> to vector<128x128xbf16>
    %cst_17 = arith.constant dense<0.000000e+00> : vector<8x128xf32>
    %70 = tpu.matmul %62, %66, %cst_17 {dimension_numbers = #tpu.dot_dimension_numbers<[1], [0], [0], [1], [0, 0, 1, 1], [], []>} : vector<8x128xbf16>, vector<128x128xbf16>, vector<8x128xf32> -> vector<8x128xf32>
    %cst_18 = arith.constant dense<0.000000e+00> : vector<8x128xf32>
    %71 = tpu.matmul %62, %69, %cst_18 {dimension_numbers = #tpu.dot_dimension_numbers<[1], [0], [0], [1], [0, 0, 1, 1], [], []>} : vector<8x128xbf16>, vector<128x128xbf16>, vector<8x128xf32> -> vector<8x128xf32>
    %72 = arith.addf %70, %71 : vector<8x128xf32>
    %cst_19 = arith.constant dense<0.000000e+00> : vector<8x128xf32>
    %73 = tpu.matmul %65, %66, %cst_19 {dimension_numbers = #tpu.dot_dimension_numbers<[1], [0], [0], [1], [0, 0, 1, 1], [], []>} : vector<8x128xbf16>, vector<128x128xbf16>, vector<8x128xf32> -> vector<8x128xf32>
    %74 = arith.addf %72, %73 : vector<8x128xf32>
    %c0_20 = arith.constant 0 : index
    %c0_21 = arith.constant 0 : index
    %75 = vector.load %arg4[%c0_20, %c0_21] : memref<1x128xf32, #tpu.memory_space<vmem>>, vector<1x128xf32>
    %76 = vector.broadcast %75 : vector<1x128xf32> to vector<8x128xf32>
    %77 = arith.addf %74, %76 : vector<8x128xf32>
    %78 = arith.addf %77, %1 : vector<8x128xf32>
    %cst_22 = arith.constant dense<0.000000e+00> : vector<8xf32>
    %79 = vector.multi_reduction <add>, %78, %cst_22 [1] : vector<8x128xf32> to vector<8xf32>
    %80 = vector.shape_cast %79 : vector<8xf32> to vector<8x1xf32>
    %cst_23 = arith.constant 1.280000e+02 : f32
    %81 = vector.broadcast %cst_23 : f32 to vector<8x1xf32>
    %82 = arith.divf %80, %81 : vector<8x1xf32>
    %83 = vector.broadcast %82 : vector<8x1xf32> to vector<8x128xf32>
    %84 = arith.subf %78, %83 : vector<8x128xf32>
    %85 = arith.mulf %84, %84 : vector<8x128xf32>
    %cst_24 = arith.constant dense<0.000000e+00> : vector<8xf32>
    %86 = vector.multi_reduction <add>, %85, %cst_24 [1] : vector<8x128xf32> to vector<8xf32>
    %87 = vector.shape_cast %86 : vector<8xf32> to vector<8x1xf32>
    %cst_25 = arith.constant 0.00787401571 : f32
    %88 = vector.broadcast %cst_25 : f32 to vector<8x1xf32>
    %89 = arith.mulf %87, %88 : vector<8x1xf32>
    %90 = tpu.reciprocal %89 : vector<8x1xf32> -> vector<8x1xf32>
    %91 = vector.broadcast %90 : vector<8x1xf32> to vector<8x128xf32>
    %92 = arith.mulf %84, %91 : vector<8x128xf32>
    %c0_26 = arith.constant 0 : index
    %c0_27 = arith.constant 0 : index
    %93 = vector.load %arg5[%c0_26, %c0_27] : memref<128x512xf32, #tpu.memory_space<vmem>>, vector<128x512xf32>
    %94 = arith.truncf %92 : vector<8x128xf32> to vector<8x128xbf16>
    %95 = arith.extf %94 : vector<8x128xbf16> to vector<8x128xf32>
    %96 = arith.subf %92, %95 : vector<8x128xf32>
    %97 = arith.truncf %96 : vector<8x128xf32> to vector<8x128xbf16>
    %98 = arith.truncf %93 : vector<128x512xf32> to vector<128x512xbf16>
    %99 = arith.extf %98 : vector<128x512xbf16> to vector<128x512xf32>
    %100 = arith.subf %93, %99 : vector<128x512xf32>
    %101 = arith.truncf %100 : vector<128x512xf32> to vector<128x512xbf16>
    %cst_28 = arith.constant dense<0.000000e+00> : vector<8x512xf32>
    %102 = tpu.matmul %94, %98, %cst_28 {dimension_numbers = #tpu.dot_dimension_numbers<[1], [0], [0], [1], [0, 0, 1, 1], [], []>} : vector<8x128xbf16>, vector<128x512xbf16>, vector<8x512xf32> -> vector<8x512xf32>
    %cst_29 = arith.constant dense<0.000000e+00> : vector<8x512xf32>
    %103 = tpu.matmul %94, %101, %cst_29 {dimension_numbers = #tpu.dot_dimension_numbers<[1], [0], [0], [1], [0, 0, 1, 1], [], []>} : vector<8x128xbf16>, vector<128x512xbf16>, vector<8x512xf32> -> vector<8x512xf32>
    %104 = arith.addf %102, %103 : vector<8x512xf32>
    %cst_30 = arith.constant dense<0.000000e+00> : vector<8x512xf32>
    %105 = tpu.matmul %97, %98, %cst_30 {dimension_numbers = #tpu.dot_dimension_numbers<[1], [0], [0], [1], [0, 0, 1, 1], [], []>} : vector<8x128xbf16>, vector<128x512xbf16>, vector<8x512xf32> -> vector<8x512xf32>
    %106 = arith.addf %104, %105 : vector<8x512xf32>
    %c0_31 = arith.constant 0 : index
    %c0_32 = arith.constant 0 : index
    %107 = vector.load %arg6[%c0_31, %c0_32] : memref<1x512xf32, #tpu.memory_space<vmem>>, vector<1x512xf32>
    %108 = vector.broadcast %107 : vector<1x512xf32> to vector<8x512xf32>
    %109 = arith.addf %106, %108 : vector<8x512xf32>
    %cst_33 = arith.constant 0.000000e+00 : f32
    %110 = vector.broadcast %cst_33 : f32 to vector<8x512xf32>
    %111 = arith.maximumf %109, %110 : vector<8x512xf32>
    %c0_34 = arith.constant 0 : index
    %c0_35 = arith.constant 0 : index
    %112 = vector.load %arg7[%c0_34, %c0_35] : memref<512x128xf32, #tpu.memory_space<vmem>>, vector<512x128xf32>
    %113 = arith.truncf %111 : vector<8x512xf32> to vector<8x512xbf16>
    %114 = arith.extf %113 : vector<8x512xbf16> to vector<8x512xf32>
    %115 = arith.subf %111, %114 : vector<8x512xf32>
    %116 = arith.truncf %115 : vector<8x512xf32> to vector<8x512xbf16>
    %117 = arith.truncf %112 : vector<512x128xf32> to vector<512x128xbf16>
    %118 = arith.extf %117 : vector<512x128xbf16> to vector<512x128xf32>
    %119 = arith.subf %112, %118 : vector<512x128xf32>
    %120 = arith.truncf %119 : vector<512x128xf32> to vector<512x128xbf16>
    %cst_36 = arith.constant dense<0.000000e+00> : vector<8x128xf32>
    %121 = tpu.matmul %113, %117, %cst_36 {dimension_numbers = #tpu.dot_dimension_numbers<[1], [0], [0], [1], [0, 0, 1, 1], [], []>} : vector<8x512xbf16>, vector<512x128xbf16>, vector<8x128xf32> -> vector<8x128xf32>
    %cst_37 = arith.constant dense<0.000000e+00> : vector<8x128xf32>
    %122 = tpu.matmul %113, %120, %cst_37 {dimension_numbers = #tpu.dot_dimension_numbers<[1], [0], [0], [1], [0, 0, 1, 1], [], []>} : vector<8x512xbf16>, vector<512x128xbf16>, vector<8x128xf32> -> vector<8x128xf32>
    %123 = arith.addf %121, %122 : vector<8x128xf32>
    %cst_38 = arith.constant dense<0.000000e+00> : vector<8x128xf32>
    %124 = tpu.matmul %116, %117, %cst_38 {dimension_numbers = #tpu.dot_dimension_numbers<[1], [0], [0], [1], [0, 0, 1, 1], [], []>} : vector<8x512xbf16>, vector<512x128xbf16>, vector<8x128xf32> -> vector<8x128xf32>
    %125 = arith.addf %123, %124 : vector<8x128xf32>
    %c0_39 = arith.constant 0 : index
    %c0_40 = arith.constant 0 : index
    %126 = vector.load %arg8[%c0_39, %c0_40] : memref<1x128xf32, #tpu.memory_space<vmem>>, vector<1x128xf32>
    %127 = vector.broadcast %126 : vector<1x128xf32> to vector<8x128xf32>
    %128 = arith.addf %125, %127 : vector<8x128xf32>
    %129 = arith.addf %128, %92 : vector<8x128xf32>
    %cst_41 = arith.constant dense<0.000000e+00> : vector<8xf32>
    %130 = vector.multi_reduction <add>, %129, %cst_41 [1] : vector<8x128xf32> to vector<8xf32>
    %131 = vector.shape_cast %130 : vector<8xf32> to vector<8x1xf32>
    %cst_42 = arith.constant 1.280000e+02 : f32
    %132 = vector.broadcast %cst_42 : f32 to vector<8x1xf32>
    %133 = arith.divf %131, %132 : vector<8x1xf32>
    %134 = vector.broadcast %133 : vector<8x1xf32> to vector<8x128xf32>
    %135 = arith.subf %129, %134 : vector<8x128xf32>
    %136 = arith.mulf %135, %135 : vector<8x128xf32>
    %cst_43 = arith.constant dense<0.000000e+00> : vector<8xf32>
    %137 = vector.multi_reduction <add>, %136, %cst_43 [1] : vector<8x128xf32> to vector<8xf32>
    %138 = vector.shape_cast %137 : vector<8xf32> to vector<8x1xf32>
    %cst_44 = arith.constant 0.00787401571 : f32
    %139 = vector.broadcast %cst_44 : f32 to vector<8x1xf32>
    %140 = arith.mulf %138, %139 : vector<8x1xf32>
    %141 = tpu.reciprocal %140 : vector<8x1xf32> -> vector<8x1xf32>
    %142 = vector.broadcast %141 : vector<8x1xf32> to vector<8x128xf32>
    %143 = arith.mulf %135, %142 : vector<8x128xf32>
    %144 = vector.shape_cast %143 : vector<8x128xf32> to vector<1x8x128xf32>
    %c0_45 = arith.constant 0 : index
    %c0_46 = arith.constant 0 : index
    %c0_47 = arith.constant 0 : index
    %145 = vector.load %arg9[%c0_45, %c0_46, %c0_47] : memref<1x8x128xf32, #tpu.memory_space<vmem>>, vector<1x8x128xf32>
    tpu.vector_store %arg9[%c0_45, %c0_46, %c0_47], %144 {strides = array<i32>} : memref<1x8x128xf32, #tpu.memory_space<vmem>>, vector<1x8x128xf32>,
    return
  }
  func.func @transform_0(%arg0: i32) -> (i32, i32, i32) {
    %c0_i32 = arith.constant 0 : i32
    %c0_i32_0 = arith.constant 0 : i32
    %c0_i32_1 = arith.constant 0 : i32
    return %arg0, %c0_i32, %c0_i32_0 : i32, i32, i32
  }
  func.func @transform_1(%arg0: i32) -> (i32, i32) {
    %c0_i32 = arith.constant 0 : i32
    %c0_i32_0 = arith.constant 0 : i32
    %c0_i32_1 = arith.constant 0 : i32
    return %c0_i32, %c0_i32_0 : i32, i32
  }
  func.func @transform_2(%arg0: i32) -> (i32, i32) {
    %c0_i32 = arith.constant 0 : i32
    %c0_i32_0 = arith.constant 0 : i32
    %c0_i32_1 = arith.constant 0 : i32
    return %c0_i32, %c0_i32_0 : i32, i32
  }
  func.func @transform_3(%arg0: i32) -> (i32, i32) {
    %c0_i32 = arith.constant 0 : i32
    %c0_i32_0 = arith.constant 0 : i32
    %c0_i32_1 = arith.constant 0 : i32
    return %c0_i32, %c0_i32_0 : i32, i32
  }
  func.func @transform_4(%arg0: i32) -> (i32, i32) {
    %c0_i32 = arith.constant 0 : i32
    %c0_i32_0 = arith.constant 0 : i32
    %c0_i32_1 = arith.constant 0 : i32
    return %c0_i32, %c0_i32_0 : i32, i32
  }
  func.func @transform_5(%arg0: i32) -> (i32, i32) {
    %c0_i32 = arith.constant 0 : i32
    %c0_i32_0 = arith.constant 0 : i32
    %c0_i32_1 = arith.constant 0 : i32
    return %c0_i32, %c0_i32_0 : i32, i32
  }
  func.func @transform_6(%arg0: i32) -> (i32, i32) {
    %c0_i32 = arith.constant 0 : i32
    %c0_i32_0 = arith.constant 0 : i32
    %c0_i32_1 = arith.constant 0 : i32
    return %c0_i32, %c0_i32_0 : i32, i32
  }
  func.func @transform_7(%arg0: i32) -> (i32, i32) {
    %c0_i32 = arith.constant 0 : i32
    %c0_i32_0 = arith.constant 0 : i32
    %c0_i32_1 = arith.constant 0 : i32
    return %c0_i32, %c0_i32_0 : i32, i32
  }
  func.func @transform_8(%arg0: i32) -> (i32, i32, i32) {
    %c0_i32 = arith.constant 0 : i32
    %c0_i32_0 = arith.constant 0 : i32
    %c0_i32_1 = arith.constant 0 : i32
    return %arg0, %c0_i32, %c0_i32_0 : i32, i32, i32
  }
}

</mosaic_0001>

<llo_original>
// kernel: model_forward.1
$region0: #{model_forward.1}
  #allocation0 [shape = 'u32[]', space=smem, size = 0x4, offset = 0x4, fixed_abs, tag = 'smem constant byte address 0x4 - core index']
  #allocation1 [shape = 'u32[72,128]{1,0:T(1,128)}', space=vmem, size = 0x9000, scoped, tag = 'internal scratch']
  %s0 = inlined_call_operand.vmem [shape: f32[2,8,128], index: 0, kind: input, shape index: {}]
  %s1 = inlined_call_operand.hbm [shape: f32[128,384], index: 1, kind: input, shape index: {}]
  %s2 = inlined_call_operand.vmem [shape: f32[128,128], index: 2, kind: input, shape index: {}]
  %s3 = inlined_call_operand.vmem [shape: f32[1,128], index: 3, kind: input, shape index: {}]
  %s4 = inlined_call_operand.hbm [shape: f32[128,512], index: 4, kind: input, shape index: {}]
  %s5 = inlined_call_operand.vmem [shape: f32[1,512], index: 5, kind: input, shape index: {}]
  %s6 = inlined_call_operand.hbm [shape: f32[512,128], index: 6, kind: input, shape index: {}]
  %s7 = inlined_call_operand.vmem [shape: f32[1,128], index: 7, kind: input, shape index: {}]
  %s8 = inlined_call_operand.hbm [shape: f32[2,8,128], index: 8, kind: output, shape index: {}]
  %s9 = sld [smem:[#allocation0]]
  $region77: #{model_forward.1} parent=0
    _
  %s11 = ssub.s32 1, %s9
  %s12 = scalar_select 0, %s11, %s9
  $region1: #{model_forward.1} parent=0
    #allocation2 [shape = 'u8[196608]{0}', space=vmem, size = 0x30000, scoped, tag = 'input window, operand 1, single buffered']
    #allocation3 [shape = 's32[2]{0}', space=sflag, size = 0x8, scoped, tag = 'scoped memory for model_forward.1']
    #allocation4 [shape = 's32[2]{0}', space=sflag, size = 0x8, scoped, tag = 'scoped memory for model_forward.1']
    #allocation5 [shape = 'u8[262144]{0}', space=vmem, size = 0x40000, scoped, tag = 'input window, operand 4, single buffered']
    #allocation6 [shape = 's32[1]{0}', space=sflag, size = 0x4, scoped, tag = 'scoped memory for model_forward.1']
    #allocation7 [shape = 'u8[262144]{0}', space=vmem, size = 0x40000, scoped, tag = 'input window, operand 6, single buffered']
    #allocation8 [shape = 'u8[8192]{0}', space=vmem, size = 0x2000, scoped, tag = 'output window, operand 0']
    %13 = vsyncpa [#allocation3], 0
    %14 = vsyncpa [#allocation6], 0
    %15 = vsyncpa [#allocation4], 0
    %s16 = scalar_lea.sflag [#allocation4], 1
    %17 = vsyncpa %s16, 0
    loop: start=0, step=1, limit=4
    $region2: #{model_forward.1} parent=1 // loop_pre_header
      _
    $region3: #{model_forward.1} parent=1 // loop_header
      %s19 = sphi 0, %s23
      %p20 = scmp.ge.s32.totalorder %s19, 4
      %s29 = sphi 0, %s31
      %s32 = sphi 0, %s29
      %s33 = sphi 0, %s32
      %s49 = sphi 0, %s33
      %s53 = sphi 0, %s53
      %s55 = sphi 0, %s53
      %s56 = sphi 0, %s55
      %s70 = sphi 0, %s56
      %s74 = sphi 0, %s74
      %s76 = sphi 0, %s74
      %s77 = sphi 0, %s76
      %s91 = sphi 0, %s77
      %s95 = sphi 0, %s95
      %s97 = sphi 0, %s95
      %s98 = sphi 0, %s97
      %s112 = sphi 0, %s98
      %s116 = sphi 0, %s116
      %s118 = sphi 0, %s116
      %s119 = sphi 0, %s118
      %s133 = sphi 0, %s119
      %s137 = sphi 0, %s137
      %s139 = sphi 0, %s137
      %s140 = sphi 0, %s139
      %s154 = sphi 0, %s140
      %s158 = sphi 0, %s158
      %s160 = sphi 0, %s158
      %s161 = sphi 0, %s160
      %s175 = sphi 0, %s161
      %s179 = sphi 0, %s179
      %s181 = sphi 0, %s179
      %s182 = sphi 0, %s181
      %s196 = sphi 0, %s182
      %s202 = sphi 0, %s204
      %s205 = sphi 0, %s202
      %s206 = sphi 0, %s205
      %s222 = sphi 0, %s206
    $region4: #{model_forward.1} parent=1 // loop_header_branch
      %22 = sbr.rel (%p20) target = $region8
    $region5: #{model_forward.1} parent=1 // loop_body
      %s24 = ssub.s32 %s19, 1
      %s25 = ssub.s32 %s19, 2
      %s26 = sadd.s32 %s19, 1
      %s27 = ssub.s32 %s19, %s26
      %p28 = scmp.eq.s32.totalorder %s27, 0
      %s30 = sadd.s32 %s29, 1
      %s31 = scalar_select %p28, %s29, %s30
      %p34 = pneg %p28
      %p35 = scmp.eq.s32.totalorder %s19, 1
      %p36 = por %p34, %p35
      %p37 = scmp.ne.s32.totalorder %s29, %s32
      %p38 = scmp.eq.s32.totalorder %s19, 0
      %p39 = por %p37, %p38
      %p40 = scmp.ne.s32.totalorder %s29, %s32
      %p41 = scmp.eq.s32.totalorder %s24, 1
      %p42 = por %p40, %p41
      %p43 = scmp.ne.s32.totalorder %s32, %s33
      %p44 = scmp.eq.s32.totalorder %s24, 0
      %p45 = por %p43, %p44
      %p46 = scmp.ne.s32.totalorder %s32, %s33
      %p47 = scmp.eq.s32.totalorder %s25, 1
      %p48 = por %p46, %p47
      %p50 = scmp.ne.s32.totalorder %s33, %s49
      %p51 = scmp.eq.s32.totalorder %s25, 0
      %p52 = por %p50, %p51
      %s54 = sadd.s32 %s53, 1
      %p57 = scmp.eq.s32.totalorder %s19, 1
      %p58 = scmp.ne.s32.totalorder %s53, %s55
      %p59 = scmp.eq.s32.totalorder %s19, 0
      %p60 = por %p58, %p59
      %p61 = scmp.ne.s32.totalorder %s53, %s55
      %p62 = scmp.eq.s32.totalorder %s24, 1
      %p63 = por %p61, %p62
      %p64 = scmp.ne.s32.totalorder %s55, %s56
      %p65 = scmp.eq.s32.totalorder %s24, 0
      %p66 = por %p64, %p65
      %p67 = scmp.ne.s32.totalorder %s55, %s56
      %p68 = scmp.eq.s32.totalorder %s25, 1
      %p69 = por %p67, %p68
      %p71 = scmp.ne.s32.totalorder %s56, %s70
      %p72 = scmp.eq.s32.totalorder %s25, 0
      %p73 = por %p71, %p72
      %s75 = sadd.s32 %s74, 1
      %p78 = scmp.eq.s32.totalorder %s19, 1
      %p79 = scmp.ne.s32.totalorder %s74, %s76
      %p80 = scmp.eq.s32.totalorder %s19, 0
      %p81 = por %p79, %p80
      %p82 = scmp.ne.s32.totalorder %s74, %s76
      %p83 = scmp.eq.s32.totalorder %s24, 1
      %p84 = por %p82, %p83
      %p85 = scmp.ne.s32.totalorder %s76, %s77
      %p86 = scmp.eq.s32.totalorder %s24, 0
      %p87 = por %p85, %p86
      %p88 = scmp.ne.s32.totalorder %s76, %s77
      %p89 = scmp.eq.s32.totalorder %s25, 1
      %p90 = por %p88, %p89
      %p92 = scmp.ne.s32.totalorder %s77, %s91
      %p93 = scmp.eq.s32.totalorder %s25, 0
      %p94 = por %p92, %p93
      %s96 = sadd.s32 %s95, 1
      %p99 = scmp.eq.s32.totalorder %s19, 1
      %p100 = scmp.ne.s32.totalorder %s95, %s97
      %p101 = scmp.eq.s32.totalorder %s19, 0
      %p102 = por %p100, %p101
      %p103 = scmp.ne.s32.totalorder %s95, %s97
      %p104 = scmp.eq.s32.totalorder %s24, 1
      %p105 = por %p103, %p104
      %p106 = scmp.ne.s32.totalorder %s97, %s98
      %p107 = scmp.eq.s32.totalorder %s24, 0
      %p108 = por %p106, %p107
      %p109 = scmp.ne.s32.totalorder %s97, %s98
      %p110 = scmp.eq.s32.totalorder %s25, 1
      %p111 = por %p109, %p110
      %p113 = scmp.ne.s32.totalorder %s98, %s112
      %p114 = scmp.eq.s32.totalorder %s25, 0
      %p115 = por %p113, %p114
      %s117 = sadd.s32 %s116, 1
      %p120 = scmp.eq.s32.totalorder %s19, 1
      %p121 = scmp.ne.s32.totalorder %s116, %s118
      %p122 = scmp.eq.s32.totalorder %s19, 0
      %p123 = por %p121, %p122
      %p124 = scmp.ne.s32.totalorder %s116, %s118
      %p125 = scmp.eq.s32.totalorder %s24, 1
      %p126 = por %p124, %p125
      %p127 = scmp.ne.s32.totalorder %s118, %s119
      %p128 = scmp.eq.s32.totalorder %s24, 0
      %p129 = por %p127, %p128
      %p130 = scmp.ne.s32.totalorder %s118, %s119
      %p131 = scmp.eq.s32.totalorder %s25, 1
      %p132 = por %p130, %p131
      %p134 = scmp.ne.s32.totalorder %s119, %s133
      %p135 = scmp.eq.s32.totalorder %s25, 0
      %p136 = por %p134, %p135
      %s138 = sadd.s32 %s137, 1
      %p141 = scmp.eq.s32.totalorder %s19, 1
      %p142 = scmp.ne.s32.totalorder %s137, %s139
      %p143 = scmp.eq.s32.totalorder %s19, 0
      %p144 = por %p142, %p143
      %p145 = scmp.ne.s32.totalorder %s137, %s139
      %p146 = scmp.eq.s32.totalorder %s24, 1
      %p147 = por %p145, %p146
      %p148 = scmp.ne.s32.totalorder %s139, %s140
      %p149 = scmp.eq.s32.totalorder %s24, 0
      %p150 = por %p148, %p149
      %p151 = scmp.ne.s32.totalorder %s139, %s140
      %p152 = scmp.eq.s32.totalorder %s25, 1
      %p153 = por %p151, %p152
      %p155 = scmp.ne.s32.totalorder %s140, %s154
      %p156 = scmp.eq.s32.totalorder %s25, 0
      %p157 = por %p155, %p156
      %s159 = sadd.s32 %s158, 1
      %p162 = scmp.eq.s32.totalorder %s19, 1
      %p163 = scmp.ne.s32.totalorder %s158, %s160
      %p164 = scmp.eq.s32.totalorder %s19, 0
      %p165 = por %p163, %p164
      %p166 = scmp.ne.s32.totalorder %s158, %s160
      %p167 = scmp.eq.s32.totalorder %s24, 1
      %p168 = por %p166, %p167
      %p169 = scmp.ne.s32.totalorder %s160, %s161
      %p170 = scmp.eq.s32.totalorder %s24, 0
      %p171 = por %p169, %p170
      %p172 = scmp.ne.s32.totalorder %s160, %s161
      %p173 = scmp.eq.s32.totalorder %s25, 1
      %p174 = por %p172, %p173
      %p176 = scmp.ne.s32.totalorder %s161, %s175
      %p177 = scmp.eq.s32.totalorder %s25, 0
      %p178 = por %p176, %p177
      %s180 = sadd.s32 %s179, 1
      %p183 = scmp.eq.s32.totalorder %s19, 1
      %p184 = scmp.ne.s32.totalorder %s179, %s181
      %p185 = scmp.eq.s32.totalorder %s19, 0
      %p186 = por %p184, %p185
      %p187 = scmp.ne.s32.totalorder %s179, %s181
      %p188 = scmp.eq.s32.totalorder %s24, 1
      %p189 = por %p187, %p188
      %p190 = scmp.ne.s32.totalorder %s181, %s182
      %p191 = scmp.eq.s32.totalorder %s24, 0
      %p192 = por %p190, %p191
      %p193 = scmp.ne.s32.totalorder %s181, %s182
      %p194 = scmp.eq.s32.totalorder %s25, 1
      %p195 = por %p193, %p194
      %p197 = scmp.ne.s32.totalorder %s182, %s196
      %p198 = scmp.eq.s32.totalorder %s25, 0
      %p199 = por %p197, %p198
      %s200 = ssub.s32 %s19, %s26
      %p201 = scmp.eq.s32.totalorder %s200, 0
      %s203 = sadd.s32 %s202, 1
      %s204 = scalar_select %p201, %s202, %s203
      %p207 = pneg %p201
      %p208 = scmp.eq.s32.totalorder %s19, 1
      %p209 = por %p207, %p208
      %p210 = scmp.ne.s32.totalorder %s202, %s205
      %p211 = scmp.eq.s32.totalorder %s19, 0
      %p212 = por %p210, %p211
      %p213 = scmp.ne.s32.totalorder %s202, %s205
      %p214 = scmp.eq.s32.totalorder %s24, 1
      %p215 = por %p213, %p214
      %p216 = scmp.ne.s32.totalorder %s205, %s206
      %p217 = scmp.eq.s32.totalorder %s24, 0
      %p218 = por %p216, %p217
      %p219 = scmp.ne.s32.totalorder %s205, %s206
      %p220 = scmp.eq.s32.totalorder %s25, 1
      %p221 = por %p219, %p220
      %p223 = scmp.ne.s32.totalorder %s206, %s222
      %p224 = scmp.eq.s32.totalorder %s25, 0
      %p225 = por %p223, %p224
      %p226 = scmp.le.s32.totalorder 1, %s19
      %p227 = scmp.lt.s32.totalorder %s19, 3
      %p228 = pnand %p226, %p227
      %p229 = pneg %p228
      // Predicated region
      $region9: #{model_forward.1} parent=5 // pred_check
        _
      $region10: #{model_forward.1} parent=5 // pred_check_branch
        %231 = sbr.rel (%p228) target = $region12
      $region11: #{model_forward.1} parent=5 // pred_region
        %s232 = ssub.s32 %s19, 1
        // Predicated region
        $region13: #{model_forward.1} parent=11 // pred_check
          %p233 = pneg %p66
        $region14: #{model_forward.1} parent=11 // pred_check_branch
          %235 = sbr.rel (%p233) target = $region16
        $region15: #{model_forward.1} parent=11 // pred_region
          %237 = vsyncadd [#allocation3], 0
          %s238 = sshll.u32 %s1, 4
          %s239 = int_to_ptr.hbm [resolvable:$true] %s238
          %s240 = sshll.u32 [#allocation2], 4
          %s241 = int_to_ptr.vmem [resolvable:$true] %s240
          %246 = dma.hbm_to_vmem [thread:$0]  %s239, 6144, %s241, [#allocation3], 384, 384, 24
        $region16: #{model_forward.1} parent=11 // pred_fallthru
          _
        // Predicated region
        $region17: #{model_forward.1} parent=11 // pred_check
          %p247 = pneg %p87
        $region18: #{model_forward.1} parent=11 // pred_check_branch
          %249 = sbr.rel (%p247) target = $region20
        $region19: #{model_forward.1} parent=11 // pred_region
          _
        $region20: #{model_forward.1} parent=11 // pred_fallthru
          _
        // Predicated region
        $region21: #{model_forward.1} parent=11 // pred_check
          %p250 = pneg %p108
        $region22: #{model_forward.1} parent=11 // pred_check_branch
          %252 = sbr.rel (%p250) target = $region24
        $region23: #{model_forward.1} parent=11 // pred_region
          _
        $region24: #{model_forward.1} parent=11 // pred_fallthru
          _
        // Predicated region
        $region25: #{model_forward.1} parent=11 // pred_check
          %p253 = pneg %p129
        $region26: #{model_forward.1} parent=11 // pred_check_branch
          %255 = sbr.rel (%p253) target = $region28
        $region27: #{model_forward.1} parent=11 // pred_region
          %257 = vsyncadd [#allocation6], 0
          %s258 = sshll.u32 %s4, 4
          %s259 = int_to_ptr.hbm [resolvable:$true] %s258
          %s260 = sshll.u32 [#allocation5], 4
          %s261 = int_to_ptr.vmem [resolvable:$true] %s260
          %266 = dma.hbm_to_vmem [thread:$0]  %s259, 8192, %s261, [#allocation6], 512, 512, 32
        $region28: #{model_forward.1} parent=11 // pred_fallthru
          _
        // Predicated region
        $region29: #{model_forward.1} parent=11 // pred_check
          %p267 = pneg %p150
        $region30: #{model_forward.1} parent=11 // pred_check_branch
          %269 = sbr.rel (%p267) target = $region32
        $region31: #{model_forward.1} parent=11 // pred_region
          _
        $region32: #{model_forward.1} parent=11 // pred_fallthru
          _
        // Predicated region
        $region33: #{model_forward.1} parent=11 // pred_check
          %p270 = pneg %p171
        $region34: #{model_forward.1} parent=11 // pred_check_branch
          %272 = sbr.rel (%p270) target = $region36
        $region35: #{model_forward.1} parent=11 // pred_region
          %274 = vsyncadd [#allocation6], 0
          %s275 = sshll.u32 %s6, 4
          %s276 = int_to_ptr.hbm [resolvable:$true] %s275
          %s277 = sshll.u32 [#allocation7], 4
          %s278 = int_to_ptr.vmem [resolvable:$true] %s277
          %283 = dma.hbm_to_vmem [thread:$0]  %s276, 8192, %s278, [#allocation6], 128, 128, 8
        $region36: #{model_forward.1} parent=11 // pred_fallthru
          _
        // Predicated region
        $region37: #{model_forward.1} parent=11 // pred_check
          %p284 = pneg %p192
        $region38: #{model_forward.1} parent=11 // pred_check_branch
          %286 = sbr.rel (%p284) target = $region40
        $region39: #{model_forward.1} parent=11 // pred_region
          _
        $region40: #{model_forward.1} parent=11 // pred_fallthru
          _
      $region12: #{model_forward.1} parent=5 // pred_fallthru
        _
      %p287 = scmp.lt.s32.totalorder %s19, 2
      // Predicated region
      $region41: #{model_forward.1} parent=5 // pred_check
        %p288 = pneg %p287
      $region42: #{model_forward.1} parent=5 // pred_check_branch
        %290 = sbr.rel (%p288) target = $region44
      $region43: #{model_forward.1} parent=5 // pred_region
        // Predicated region
        $region45: #{model_forward.1} parent=43 // pred_check
          %p291 = pneg %p39
        $region46: #{model_forward.1} parent=43 // pred_check_branch
          %293 = sbr.rel (%p291) target = $region48
        $region47: #{model_forward.1} parent=43 // pred_region
          %p294 = scmp.lt.s32.totalorder %s19, 1
          %s295 = scalar_select %p294, %s19, 1
          %s296 = smul.addr %s295, 8
          %s297 = scalar_lea.vmem %s0, %s296
        $region48: #{model_forward.1} parent=43 // pred_fallthru
          _
      $region44: #{model_forward.1} parent=5 // pred_fallthru
        _
      %p298 = scmp.le.s32.totalorder 1, %s19
      %p299 = scmp.lt.s32.totalorder %s19, 3
      %p300 = pnand %p298, %p299
      %p301 = pneg %p300
      // Predicated region
      $region49: #{model_forward.1} parent=5 // pred_check
        _
      $region50: #{model_forward.1} parent=5 // pred_check_branch
        %303 = sbr.rel (%p300) target = $region52
      $region51: #{model_forward.1} parent=5 // pred_region
        %s304 = ssub.s32 %s19, 1
        // Predicated region
        $region53: #{model_forward.1} parent=51 // pred_check
          %p305 = pneg %p66
        $region54: #{model_forward.1} parent=51 // pred_check_branch
          %307 = sbr.rel (%p305) target = $region56
        $region55: #{model_forward.1} parent=51 // pred_region
          %309 = dma.done [#allocation3], 6144
        $region56: #{model_forward.1} parent=51 // pred_fallthru
          _
        // Predicated region
        $region57: #{model_forward.1} parent=51 // pred_check
          %p310 = pneg %p129
        $region58: #{model_forward.1} parent=51 // pred_check_branch
          %312 = sbr.rel (%p310) target = $region60
        $region59: #{model_forward.1} parent=51 // pred_region
          %314 = dma.done [#allocation6], 8192
        $region60: #{model_forward.1} parent=51 // pred_fallthru
          _
        // Predicated region
        $region61: #{model_forward.1} parent=51 // pred_check
          %p315 = pneg %p171
        $region62: #{model_forward.1} parent=51 // pred_check_branch
          %317 = sbr.rel (%p315) target = $region64
        $region63: #{model_forward.1} parent=51 // pred_region
          %319 = dma.done [#allocation6], 8192
        $region64: #{model_forward.1} parent=51 // pred_fallthru
          _
        %p320 = scmp.lt.s32.totalorder %s24, 1
        %s321 = scalar_select %p320, %s24, 1
        %s322 = smul.addr %s321, 8
        %s323 = scalar_lea.vmem %s0, %s322
        %p324 = pneg %p45
        %p325 = pneg %p42
        %p326 = pneg %p66
        %p327 = pneg %p63
        %p328 = pneg %p87
        %p329 = pneg %p84
        %p330 = pneg %p108
        %p331 = pneg %p105
        %p332 = pneg %p129
        %p333 = pneg %p126
        %p334 = pneg %p150
        %p335 = pneg %p147
        %p336 = pneg %p171
        %p337 = pneg %p168
        %p338 = pneg %p192
        %p339 = pneg %p189
        %p340 = pneg %p218
        %p341 = pneg %p215
        %s342 = sand.u32 %s205, 1
        %s343 = scalar_lea.sflag [#allocation4], %s342
        %s344 = sand.u32 %s205, 1
        %s345 = smul.addr %s344, 8
        %s346 = scalar_lea.vmem [#allocation8], %s345
        %p347 = scmp.lt.s32.totalorder %s24, 1
        %s348 = scalar_select %p347, %s24, 1
        %s349 = smul.addr %s348, 8
        %s350 = scalar_lea.vmem %s0, %s349
        %v352 = vld [vmem:[%s350] sm:$0xff]
        %v353 = vld [vmem:[#allocation2] sm:$0xff]
        %v354 = vld [vmem:[#allocation2 + $0x8] sm:$0xff]
        %v355 = vld [vmem:[#allocation2 + $0x10] sm:$0xff]
        %v356 = vld [vmem:[#allocation2 + $0x18] sm:$0xff]
        %v357 = vld [vmem:[#allocation2 + $0x20] sm:$0xff]
        %v358 = vld [vmem:[#allocation2 + $0x28] sm:$0xff]
        %v359 = vld [vmem:[#allocation2 + $0x30] sm:$0xff]
        %v360 = vld [vmem:[#allocation2 + $0x38] sm:$0xff]
        %v361 = vld [vmem:[#allocation2 + $0x40] sm:$0xff]
        %v362 = vld [vmem:[#allocation2 + $0x48] sm:$0xff]
        %v363 = vld [vmem:[#allocation2 + $0x50] sm:$0xff]
        %v364 = vld [vmem:[#allocation2 + $0x58] sm:$0xff]
        %v365 = vld [vmem:[#allocation2 + $0x60] sm:$0xff]
        %v366 = vld [vmem:[#allocation2 + $0x68] sm:$0xff]
        %v367 = vld [vmem:[#allocation2 + $0x70] sm:$0xff]
        %v368 = vld [vmem:[#allocation2 + $0x78] sm:$0xff]
        %v369 = vld [vmem:[#allocation2 + $0x80] sm:$0xff]
        %v370 = vld [vmem:[#allocation2 + $0x88] sm:$0xff]
        %v371 = vld [vmem:[#allocation2 + $0x90] sm:$0xff]
        %v372 = vld [vmem:[#allocation2 + $0x98] sm:$0xff]
        %v373 = vld [vmem:[#allocation2 + $0xa0] sm:$0xff]
        %v374 = vld [vmem:[#allocation2 + $0xa8] sm:$0xff]
        %v375 = vld [vmem:[#allocation2 + $0xb0] sm:$0xff]
        %v376 = vld [vmem:[#allocation2 + $0xb8] sm:$0xff]
        %v377 = vld [vmem:[#allocation2 + $0xc0] sm:$0xff]
        %v378 = vld [vmem:[#allocation2 + $0xc8] sm:$0xff]
        %v379 = vld [vmem:[#allocation2 + $0xd0] sm:$0xff]
        %v380 = vld [vmem:[#allocation2 + $0xd8] sm:$0xff]
        %v381 = vld [vmem:[#allocation2 + $0xe0] sm:$0xff]
        %v382 = vld [vmem:[#allocation2 + $0xe8] sm:$0xff]
        %v383 = vld [vmem:[#allocation2 + $0xf0] sm:$0xff]
        %v384 = vld [vmem:[#allocation2 + $0xf8] sm:$0xff]
        %v385 = vld [vmem:[#allocation2 + $0x100] sm:$0xff]
        %v386 = vld [vmem:[#allocation2 + $0x108] sm:$0xff]
        %v387 = vld [vmem:[#allocation2 + $0x110] sm:$0xff]
        %v388 = vld [vmem:[#allocation2 + $0x118] sm:$0xff]
        %v389 = vld [vmem:[#allocation2 + $0x120] sm:$0xff]
        %v390 = vld [vmem:[#allocation2 + $0x128] sm:$0xff]
        %v391 = vld [vmem:[#allocation2 + $0x130] sm:$0xff]
        %v392 = vld [vmem:[#allocation2 + $0x138] sm:$0xff]
        %v393 = vld [vmem:[#allocation2 + $0x140] sm:$0xff]
        %v394 = vld [vmem:[#allocation2 + $0x148] sm:$0xff]
        %v395 = vld [vmem:[#allocation2 + $0x150] sm:$0xff]
        %v396 = vld [vmem:[#allocation2 + $0x158] sm:$0xff]
        %v397 = vld [vmem:[#allocation2 + $0x160] sm:$0xff]
        %v398 = vld [vmem:[#allocation2 + $0x168] sm:$0xff]
        %v399 = vld [vmem:[#allocation2 + $0x170] sm:$0xff]
        %v400 = vld [vmem:[#allocation2 + $0x178] sm:$0xff]
        %v401 = vpack.c.bf16 %v352, %v352
        %v402 = vunpack.c.l.bf16 %v401
        %v403 = vsub.f32 %v352, %v402
        %v404 = vpack.c.bf16 %v403, %v403
        %v405 = vpack.c.bf16 %v354, %v353
        %v406 = vpack.c.bf16 %v355, %v355
        %v407 = vpack.c.bf16 %v357, %v356
        %v408 = vpack.c.bf16 %v358, %v358
        %v409 = vpack.c.bf16 %v360, %v359
        %v410 = vpack.c.bf16 %v361, %v361
        %v411 = vpack.c.bf16 %v363, %v362
        %v412 = vpack.c.bf16 %v364, %v364
        %v413 = vpack.c.bf16 %v366, %v365
        %v414 = vpack.c.bf16 %v367, %v367
        %v415 = vpack.c.bf16 %v369, %v368
        %v416 = vpack.c.bf16 %v370, %v370
        %v417 = vpack.c.bf16 %v372, %v371
        %v418 = vpack.c.bf16 %v373, %v373
        %v419 = vpack.c.bf16 %v375, %v374
        %v420 = vpack.c.bf16 %v376, %v376
        %v421 = vpack.c.bf16 %v378, %v377
        %v422 = vpack.c.bf16 %v379, %v379
        %v423 = vpack.c.bf16 %v381, %v380
        %v424 = vpack.c.bf16 %v382, %v382
        %v425 = vpack.c.bf16 %v384, %v383
        %v426 = vpack.c.bf16 %v385, %v385
        %v427 = vpack.c.bf16 %v387, %v386
        %v428 = vpack.c.bf16 %v388, %v388
        %v429 = vpack.c.bf16 %v390, %v389
        %v430 = vpack.c.bf16 %v391, %v391
        %v431 = vpack.c.bf16 %v393, %v392
        %v432 = vpack.c.bf16 %v394, %v394
        %v433 = vpack.c.bf16 %v396, %v395
        %v434 = vpack.c.bf16 %v397, %v397
        %v435 = vpack.c.bf16 %v399, %v398
        %v436 = vpack.c.bf16 %v400, %v400
        %v437 = vunpack.c.l.bf16 %v405
        %v438 = vunpack.c.h.bf16 %v405
        %v439 = vunpack.c.l.bf16 %v406
        %v440 = vunpack.c.l.bf16 %v407
        %v441 = vunpack.c.h.bf16 %v407
        %v442 = vunpack.c.l.bf16 %v408
        %v443 = vunpack.c.l.bf16 %v409
        %v444 = vunpack.c.h.bf16 %v409
        %v445 = vunpack.c.l.bf16 %v410
        %v446 = vunpack.c.l.bf16 %v411
        %v447 = vunpack.c.h.bf16 %v411
        %v448 = vunpack.c.l.bf16 %v412
        %v449 = vunpack.c.l.bf16 %v413
        %v450 = vunpack.c.h.bf16 %v413
        %v451 = vunpack.c.l.bf16 %v414
        %v452 = vunpack.c.l.bf16 %v415
        %v453 = vunpack.c.h.bf16 %v415
        %v454 = vunpack.c.l.bf16 %v416
        %v455 = vunpack.c.l.bf16 %v417
        %v456 = vunpack.c.h.bf16 %v417
        %v457 = vunpack.c.l.bf16 %v418
        %v458 = vunpack.c.l.bf16 %v419
        %v459 = vunpack.c.h.bf16 %v419
        %v460 = vunpack.c.l.bf16 %v420
        %v461 = vunpack.c.l.bf16 %v421
        %v462 = vunpack.c.h.bf16 %v421
        %v463 = vunpack.c.l.bf16 %v422
        %v464 = vunpack.c.l.bf16 %v423
        %v465 = vunpack.c.h.bf16 %v423
        %v466 = vunpack.c.l.bf16 %v424
        %v467 = vunpack.c.l.bf16 %v425
        %v468 = vunpack.c.h.bf16 %v425
        %v469 = vunpack.c.l.bf16 %v426
        %v470 = vunpack.c.l.bf16 %v427
        %v471 = vunpack.c.h.bf16 %v427
        %v472 = vunpack.c.l.bf16 %v428
        %v473 = vunpack.c.l.bf16 %v429
        %v474 = vunpack.c.h.bf16 %v429
        %v475 = vunpack.c.l.bf16 %v430
        %v476 = vunpack.c.l.bf16 %v431
        %v477 = vunpack.c.h.bf16 %v431
        %v478 = vunpack.c.l.bf16 %v432
        %v479 = vunpack.c.l.bf16 %v433
        %v480 = vunpack.c.h.bf16 %v433
        %v481 = vunpack.c.l.bf16 %v434
        %v482 = vunpack.c.l.bf16 %v435
        %v483 = vunpack.c.h.bf16 %v435
        %v484 = vunpack.c.l.bf16 %v436
        %v485 = vsub.f32 %v353, %v437
        %v486 = vsub.f32 %v354, %v438
        %v487 = vsub.f32 %v355, %v439
        %v488 = vsub.f32 %v356, %v440
        %v489 = vsub.f32 %v357, %v441
        %v490 = vsub.f32 %v358, %v442
        %v491 = vsub.f32 %v359, %v443
        %v492 = vsub.f32 %v360, %v444
        %v493 = vsub.f32 %v361, %v445
        %v494 = vsub.f32 %v362, %v446
        %v495 = vsub.f32 %v363, %v447
        %v496 = vsub.f32 %v364, %v448
        %v497 = vsub.f32 %v365, %v449
        %v498 = vsub.f32 %v366, %v450
        %v499 = vsub.f32 %v367, %v451
        %v500 = vsub.f32 %v368, %v452
        %v501 = vsub.f32 %v369, %v453
        %v502 = vsub.f32 %v370, %v454
        %v503 = vsub.f32 %v371, %v455
        %v504 = vsub.f32 %v372, %v456
        %v505 = vsub.f32 %v373, %v457
        %v506 = vsub.f32 %v374, %v458
        %v507 = vsub.f32 %v375, %v459
        %v508 = vsub.f32 %v376, %v460
        %v509 = vsub.f32 %v377, %v461
        %v510 = vsub.f32 %v378, %v462
        %v511 = vsub.f32 %v379, %v463
        %v512 = vsub.f32 %v380, %v464
        %v513 = vsub.f32 %v381, %v465
        %v514 = vsub.f32 %v382, %v466
        %v515 = vsub.f32 %v383, %v467
        %v516 = vsub.f32 %v384, %v468
        %v517 = vsub.f32 %v385, %v469
        %v518 = vsub.f32 %v386, %v470
        %v519 = vsub.f32 %v387, %v471
        %v520 = vsub.f32 %v388, %v472
        %v521 = vsub.f32 %v389, %v473
        %v522 = vsub.f32 %v390, %v474
        %v523 = vsub.f32 %v391, %v475
        %v524 = vsub.f32 %v392, %v476
        %v525 = vsub.f32 %v393, %v477
        %v526 = vsub.f32 %v394, %v478
        %v527 = vsub.f32 %v395, %v479
        %v528 = vsub.f32 %v396, %v480
        %v529 = vsub.f32 %v397, %v481
        %v530 = vsub.f32 %v398, %v482
        %v531 = vsub.f32 %v399, %v483
        %v532 = vsub.f32 %v400, %v484
        %v533 = vpack.c.bf16 %v488, %v485
        %v534 = vpack.c.bf16 %v489, %v486
        %v535 = vpack.c.bf16 %v490, %v487
        %v536 = vpack.c.bf16 %v494, %v491
        %v537 = vpack.c.bf16 %v495, %v492
        %v538 = vpack.c.bf16 %v496, %v493
        %v539 = vpack.c.bf16 %v500, %v497
        %v540 = vpack.c.bf16 %v501, %v498
        %v541 = vpack.c.bf16 %v502, %v499
        %v542 = vpack.c.bf16 %v506, %v503
        %v543 = vpack.c.bf16 %v507, %v504
        %v544 = vpack.c.bf16 %v508, %v505
        %v545 = vpack.c.bf16 %v512, %v509
        %v546 = vpack.c.bf16 %v513, %v510
        %v547 = vpack.c.bf16 %v514, %v511
        %v548 = vpack.c.bf16 %v518, %v515
        %v549 = vpack.c.bf16 %v519, %v516
        %v550 = vpack.c.bf16 %v520, %v517
        %v551 = vpack.c.bf16 %v524, %v521
        %v552 = vpack.c.bf16 %v525, %v522
        %v553 = vpack.c.bf16 %v526, %v523
        %v554 = vpack.c.bf16 %v530, %v527
        %v555 = vpack.c.bf16 %v531, %v528
        %v556 = vpack.c.bf16 %v532, %v529
        %557 = vmatpush.bf16.msra.mxu0 %v554
        %558 = vmatpush.bf16.msra.mxu0 %v551
        %559 = vmatpush.bf16.msra.mxu0 %v548
        %560 = vmatpush.bf16.msra.mxu0 %v545
        %561 = vmatpush.bf16.msra.mxu0 %v542
        %562 = vmatpush.bf16.msra.mxu0 %v539
        %563 = vmatpush.bf16.msra.mxu0 %v536
        %564 = vmatpush.bf16.msra.mxu0 %v533
        %565 = vmatmul.bf16.gmra.mxu0 %v401
        %v566 = vpop.f32.mrf.mxu0
        %v567 = vadd.f32 0.0, %v566
        %v568 = vpop.f32.mrf.mxu0
        %569 = vdwg.mxu0
        %570 = vmatpush.bf16.msra.mxu0 %v555
        %571 = vmatpush.bf16.msra.mxu0 %v552
        %572 = vmatpush.bf16.msra.mxu0 %v549
        %573 = vmatpush.bf16.msra.mxu0 %v546
        %574 = vmatpush.bf16.msra.mxu0 %v543
        %575 = vmatpush.bf16.msra.mxu0 %v540
        %576 = vmatpush.bf16.msra.mxu0 %v537
        %577 = vmatpush.bf16.msra.mxu0 %v534
        %578 = vmatmul.bf16.gmra.mxu0 %v401
        %v579 = vpop.f32.mrf.mxu0
        %v580 = vadd.f32 0.0, %v579
        %v581 = vpop.f32.mrf.mxu0
        %582 = vdwg.mxu0
        %583 = vmatpush.bf16.msra.mxu0 %v556
        %584 = vmatpush.bf16.msra.mxu0 %v553
        %585 = vmatpush.bf16.msra.mxu0 %v550
        %586 = vmatpush.bf16.msra.mxu0 %v547
        %587 = vmatpush.bf16.msra.mxu0 %v544
        %588 = vmatpush.bf16.msra.mxu0 %v541
        %589 = vmatpush.bf16.msra.mxu0 %v538
        %590 = vmatpush.bf16.msra.mxu0 %v535
        %591 = vmatmul.bf16.gmra.mxu0 %v401
        %v592 = vpop.f32.mrf.mxu0
        %v593 = vadd.f32 0.0, %v592
        %v594 = vpop.f32.mrf.mxu0
        %595 = vdwg.mxu0
        %v628 = vunpack.c.l.b16 %v405
        %v629 = vunpack.c.h.b16 %v405
        %v630 = vunpack.c.l.b16 %v406
        %v631 = vunpack.c.l.b16 %v407
        %v632 = vunpack.c.h.b16 %v407
        %v633 = vunpack.c.l.b16 %v408
        %v634 = vunpack.c.l.b16 %v409
        %v635 = vunpack.c.h.b16 %v409
        %v636 = vunpack.c.l.b16 %v410
        %v637 = vunpack.c.l.b16 %v411
        %v638 = vunpack.c.h.b16 %v411
        %v639 = vunpack.c.l.b16 %v412
        %v640 = vunpack.c.l.b16 %v413
        %v641 = vunpack.c.h.b16 %v413
        %v642 = vunpack.c.l.b16 %v414
        %v643 = vunpack.c.l.b16 %v415
        %v644 = vunpack.c.h.b16 %v415
        %v645 = vunpack.c.l.b16 %v416
        %v646 = vunpack.c.l.b16 %v417
        %v647 = vunpack.c.h.b16 %v417
        %v648 = vunpack.c.l.b16 %v418
        %v649 = vunpack.c.l.b16 %v419
        %v650 = vunpack.c.h.b16 %v419
        %v651 = vunpack.c.l.b16 %v420
        %v652 = vunpack.c.l.b16 %v421
        %v653 = vunpack.c.h.b16 %v421
        %v654 = vunpack.c.l.b16 %v422
        %v655 = vunpack.c.l.b16 %v423
        %v656 = vunpack.c.h.b16 %v423
        %v657 = vunpack.c.l.b16 %v424
        %v658 = vunpack.c.l.b16 %v425
        %v659 = vunpack.c.h.b16 %v425
        %v660 = vunpack.c.l.b16 %v426
        %v661 = vunpack.c.l.b16 %v427
        %v662 = vunpack.c.h.b16 %v427
        %v663 = vunpack.c.l.b16 %v428
        %v664 = vunpack.c.l.b16 %v429
        %v665 = vunpack.c.h.b16 %v429
        %v666 = vunpack.c.l.b16 %v430
        %v667 = vunpack.c.l.b16 %v431
        %v668 = vunpack.c.h.b16 %v431
        %v669 = vunpack.c.l.b16 %v432
        %v670 = vunpack.c.l.b16 %v433
        %v671 = vunpack.c.h.b16 %v433
        %v672 = vunpack.c.l.b16 %v434
        %v673 = vunpack.c.l.b16 %v435
        %v674 = vunpack.c.h.b16 %v435
        %v675 = vunpack.c.l.b16 %v436
        %v676 = vpack.c.b16 %v631, %v628
        %v677 = vpack.c.b16 %v632, %v629
        %v678 = vpack.c.b16 %v633, %v630
        %v679 = vpack.c.b16 %v637, %v634
        %v680 = vpack.c.b16 %v638, %v635
        %v681 = vpack.c.b16 %v639, %v636
        %v682 = vpack.c.b16 %v643, %v640
        %v683 = vpack.c.b16 %v644, %v641
        %v684 = vpack.c.b16 %v645, %v642
        %v685 = vpack.c.b16 %v649, %v646
        %v686 = vpack.c.b16 %v650, %v647
        %v687 = vpack.c.b16 %v651, %v648
        %v688 = vpack.c.b16 %v655, %v652
        %v689 = vpack.c.b16 %v656, %v653
        %v690 = vpack.c.b16 %v657, %v654
        %v691 = vpack.c.b16 %v661, %v658
        %v692 = vpack.c.b16 %v662, %v659
        %v693 = vpack.c.b16 %v663, %v660
        %v694 = vpack.c.b16 %v667, %v664
        %v695 = vpack.c.b16 %v668, %v665
        %v696 = vpack.c.b16 %v669, %v666
        %v697 = vpack.c.b16 %v673, %v670
        %v698 = vpack.c.b16 %v674, %v671
        %v699 = vpack.c.b16 %v675, %v672
        %724 = vmatpush.bf16.msra.mxu0 %v697
        %725 = vmatpush.bf16.msra.mxu0 %v694
        %726 = vmatpush.bf16.msra.mxu0 %v691
        %727 = vmatpush.bf16.msra.mxu0 %v688
        %728 = vmatpush.bf16.msra.mxu0 %v685
        %729 = vmatpush.bf16.msra.mxu0 %v682
        %730 = vmatpush.bf16.msra.mxu0 %v679
        %731 = vmatpush.bf16.msra.mxu0 %v676
        %732 = vmatmul.bf16.gmra.mxu0 %v401
        %v733 = vpop.f32.mrf.mxu0
        %v734 = vadd.f32 %v567, %v733
        %v735 = vpop.f32.mrf.mxu0
        %736 = vdwg.mxu0
        %737 = vmatpush.bf16.msra.mxu0 %v698
        %738 = vmatpush.bf16.msra.mxu0 %v695
        %739 = vmatpush.bf16.msra.mxu0 %v692
        %740 = vmatpush.bf16.msra.mxu0 %v689
        %741 = vmatpush.bf16.msra.mxu0 %v686
        %742 = vmatpush.bf16.msra.mxu0 %v683
        %743 = vmatpush.bf16.msra.mxu0 %v680
        %744 = vmatpush.bf16.msra.mxu0 %v677
        %745 = vmatmul.bf16.gmra.mxu0 %v401
        %v746 = vpop.f32.mrf.mxu0
        %v747 = vadd.f32 %v580, %v746
        %v748 = vpop.f32.mrf.mxu0
        %749 = vdwg.mxu0
        %750 = vmatpush.bf16.msra.mxu0 %v699
        %751 = vmatpush.bf16.msra.mxu0 %v696
        %752 = vmatpush.bf16.msra.mxu0 %v693
        %753 = vmatpush.bf16.msra.mxu0 %v690
        %754 = vmatpush.bf16.msra.mxu0 %v687
        %755 = vmatpush.bf16.msra.mxu0 %v684
        %756 = vmatpush.bf16.msra.mxu0 %v681
        %757 = vmatpush.bf16.msra.mxu0 %v678
        %758 = vmatmul.bf16.gmra.mxu0 %v401
        %v759 = vpop.f32.mrf.mxu0
        %v760 = vadd.f32 %v593, %v759
        %v761 = vpop.f32.mrf.mxu0
        %762 = vdwg.mxu0
        %763 = vmatpush.bf16.msra.mxu0 %v697
        %764 = vmatpush.bf16.msra.mxu0 %v694
        %765 = vmatpush.bf16.msra.mxu0 %v691
        %766 = vmatpush.bf16.msra.mxu0 %v688
        %767 = vmatpush.bf16.msra.mxu0 %v685
        %768 = vmatpush.bf16.msra.mxu0 %v682
        %769 = vmatpush.bf16.msra.mxu0 %v679
        %770 = vmatpush.bf16.msra.mxu0 %v676
        %771 = vmatmul.bf16.gmra.mxu0 %v404
        %v772 = vpop.f32.mrf.mxu0
        %v773 = vadd.f32 0.0, %v772
        %v774 = vpop.f32.mrf.mxu0
        %775 = vdwg.mxu0
        %776 = vmatpush.bf16.msra.mxu0 %v698
        %777 = vmatpush.bf16.msra.mxu0 %v695
        %778 = vmatpush.bf16.msra.mxu0 %v692
        %779 = vmatpush.bf16.msra.mxu0 %v689
        %780 = vmatpush.bf16.msra.mxu0 %v686
        %781 = vmatpush.bf16.msra.mxu0 %v683
        %782 = vmatpush.bf16.msra.mxu0 %v680
        %783 = vmatpush.bf16.msra.mxu0 %v677
        %784 = vmatmul.bf16.gmra.mxu0 %v404
        %v785 = vpop.f32.mrf.mxu0
        %v786 = vadd.f32 0.0, %v785
        %v787 = vpop.f32.mrf.mxu0
        %788 = vdwg.mxu0
        %789 = vmatpush.bf16.msra.mxu0 %v699
        %790 = vmatpush.bf16.msra.mxu0 %v696
        %791 = vmatpush.bf16.msra.mxu0 %v693
        %792 = vmatpush.bf16.msra.mxu0 %v690
        %793 = vmatpush.bf16.msra.mxu0 %v687
        %794 = vmatpush.bf16.msra.mxu0 %v684
        %795 = vmatpush.bf16.msra.mxu0 %v681
        %796 = vmatpush.bf16.msra.mxu0 %v678
        %797 = vmatmul.bf16.gmra.mxu0 %v404
        %v798 = vpop.f32.mrf.mxu0
        %v799 = vadd.f32 0.0, %v798
        %v800 = vpop.f32.mrf.mxu0
        %801 = vdwg.mxu0
        %v802 = vadd.f32 %v734, %v773
        %v803 = vadd.f32 %v747, %v786
        %v804 = vadd.f32 %v760, %v799
        %v805 = vmul.f32 %v802, 0.088388346
        %v806 = vpack.c.bf16 %v805, %v805
        %v807 = vunpack.c.l.bf16 %v806
        %v808 = vsub.f32 %v805, %v807
        %v809 = vpack.c.bf16 %v808, %v808
        %v810 = vpack.c.bf16 %v803, %v803
        %v811 = vunpack.c.l.bf16 %v810
        %v812 = vsub.f32 %v803, %v811
        %v813 = vpack.c.bf16 %v812, %v812
        %814 = vmatpush.bf16.xpose.msra.mxu0 0
        %815 = vmatpush.bf16.xpose.msra.mxu0 0
        %816 = vmatpush.bf16.xpose.msra.mxu0 0
        %817 = vmatpush.bf16.xpose.msra.mxu0 0
        %818 = vmatpush.bf16.xpose.msra.mxu0 0
        %819 = vmatpush.bf16.xpose.msra.mxu0 0
        %820 = vmatpush.bf16.xpose.msra.mxu0 0
        %821 = vmatpush.bf16.xpose.msra.mxu0 %v813
        %822 = vmatmul.bf16.gmra.mxu0 %v806
        %v823 = vpop.f32.mrf.mxu0
        %v824 = vadd.f32 0.0, %v823
        %v825 = vpop.f32.mrf.mxu0
        %826 = vdwg.mxu0
        %827 = vmatpush.bf16.xpose.msra.mxu0 0
        %828 = vmatpush.bf16.xpose.msra.mxu0 0
        %829 = vmatpush.bf16.xpose.msra.mxu0 0
        %830 = vmatpush.bf16.xpose.msra.mxu0 0
        %831 = vmatpush.bf16.xpose.msra.mxu0 0
        %832 = vmatpush.bf16.xpose.msra.mxu0 0
        %833 = vmatpush.bf16.xpose.msra.mxu0 0
        %834 = vmatpush.bf16.xpose.msra.mxu0 %v810
        %835 = vmatmul.bf16.gmra.mxu0 %v806
        %v836 = vpop.f32.mrf.mxu0
        %v837 = vadd.f32 %v824, %v836
        %v838 = vpop.f32.mrf.mxu0
        %839 = vdwg.mxu0
        %840 = vmatpush.bf16.xpose.msra.mxu0 0
        %841 = vmatpush.bf16.xpose.msra.mxu0 0
        %842 = vmatpush.bf16.xpose.msra.mxu0 0
        %843 = vmatpush.bf16.xpose.msra.mxu0 0
        %844 = vmatpush.bf16.xpose.msra.mxu0 0
        %845 = vmatpush.bf16.xpose.msra.mxu0 0
        %846 = vmatpush.bf16.xpose.msra.mxu0 0
        %847 = vmatpush.bf16.xpose.msra.mxu0 %v810
        %848 = vmatmul.bf16.gmra.mxu0 %v809
        %v849 = vpop.f32.mrf.mxu0
        %v850 = vadd.f32 0.0, %v849
        %v851 = vpop.f32.mrf.mxu0
        %852 = vdwg.mxu0
        %v853 = vadd.f32 %v837, %v850
        %vm854 = vcmask 64512
        %v855 = vsel %vm854, %v853, -inf
        %856 = vmax.xlane.f32.xlu0 %v855
        %v857 = vpop.xlane.xlu0 %856
        %v858 = vsub.f32 %v853, %v857
        %v859 = vmul.f32 %v858, 1.442695
        %v860 = vpow.pop %v859
        %v861 = vsel %vm854, %v860, 0.0
        %862 = vadd.xlane.f32.xlu0 %v861
        %v863 = vpop.xlane.xlu0 %862
        %v864 = vrcp.pop %v863
        %v865 = vmul.f32 %v860, %v864
        %v866 = vpack.c.bf16 %v865, %v865
        %v867 = vunpack.c.l.bf16 %v866
        %v868 = vsub.f32 %v865, %v867
        %v869 = vpack.c.bf16 %v868, %v868
        %v870 = vpack.c.bf16 %v804, %v804
        %v871 = vunpack.c.l.bf16 %v870
        %v872 = vsub.f32 %v804, %v871
        %v873 = vpack.c.bf16 %v872, %v872
        %v875 = vsel %vm854, %v866, 0
        %vm877 = vcmask 1043456
        %v879 = vsel %vm877, %v873, 0
        %881 = vmatpush.bf16.msra.mxu0 0
        %882 = vmatpush.bf16.msra.mxu0 0
        %883 = vmatpush.bf16.msra.mxu0 0
        %884 = vmatpush.bf16.msra.mxu0 0
        %885 = vmatpush.bf16.msra.mxu0 0
        %886 = vmatpush.bf16.msra.mxu0 0
        %887 = vmatpush.bf16.msra.mxu0 0
        %888 = vmatpush.bf16.msra.mxu0 %v879
        %889 = vmatmul.bf16.gmra.mxu0 %v875
        %v890 = vpop.f32.mrf.mxu0
        %v891 = vadd.f32 0.0, %v890
        %v892 = vpop.f32.mrf.mxu0
        %893 = vdwg.mxu0
        %v895 = vsel %vm877, %v870, 0
        %897 = vmatpush.bf16.msra.mxu0 0
        %898 = vmatpush.bf16.msra.mxu0 0
        %899 = vmatpush.bf16.msra.mxu0 0
        %900 = vmatpush.bf16.msra.mxu0 0
        %901 = vmatpush.bf16.msra.mxu0 0
        %902 = vmatpush.bf16.msra.mxu0 0
        %903 = vmatpush.bf16.msra.mxu0 0
        %904 = vmatpush.bf16.msra.mxu0 %v895
        %905 = vmatmul.bf16.gmra.mxu0 %v875
        %v906 = vpop.f32.mrf.mxu0
        %v907 = vadd.f32 %v891, %v906
        %v908 = vpop.f32.mrf.mxu0
        %909 = vdwg.mxu0
        %v911 = vsel %vm854, %v869, 0
        %913 = vmatpush.bf16.msra.mxu0 0
        %914 = vmatpush.bf16.msra.mxu0 0
        %915 = vmatpush.bf16.msra.mxu0 0
        %916 = vmatpush.bf16.msra.mxu0 0
        %917 = vmatpush.bf16.msra.mxu0 0
        %918 = vmatpush.bf16.msra.mxu0 0
        %919 = vmatpush.bf16.msra.mxu0 0
        %920 = vmatpush.bf16.msra.mxu0 %v895
        %921 = vmatmul.bf16.gmra.mxu0 %v911
        %v922 = vpop.f32.mrf.mxu0
        %v923 = vadd.f32 0.0, %v922
        %v924 = vpop.f32.mrf.mxu0
        %925 = vdwg.mxu0
        %v926 = vadd.f32 %v907, %v923
        %v927 = vld [vmem:[%s2] sm:$0xff]
        %v928 = vld [vmem:[%s2 + $0x8] sm:$0xff]
        %v929 = vld [vmem:[%s2 + $0x10] sm:$0xff]
        %v930 = vld [vmem:[%s2 + $0x18] sm:$0xff]
        %v931 = vld [vmem:[%s2 + $0x20] sm:$0xff]
        %v932 = vld [vmem:[%s2 + $0x28] sm:$0xff]
        %v933 = vld [vmem:[%s2 + $0x30] sm:$0xff]
        %v934 = vld [vmem:[%s2 + $0x38] sm:$0xff]
        %v935 = vld [vmem:[%s2 + $0x40] sm:$0xff]
        %v936 = vld [vmem:[%s2 + $0x48] sm:$0xff]
        %v937 = vld [vmem:[%s2 + $0x50] sm:$0xff]
        %v938 = vld [vmem:[%s2 + $0x58] sm:$0xff]
        %v939 = vld [vmem:[%s2 + $0x60] sm:$0xff]
        %v940 = vld [vmem:[%s2 + $0x68] sm:$0xff]
        %v941 = vld [vmem:[%s2 + $0x70] sm:$0xff]
        %v942 = vld [vmem:[%s2 + $0x78] sm:$0xff]
        %v943 = vpack.c.bf16 %v926, %v926
        %v944 = vunpack.c.l.bf16 %v943
        %v945 = vsub.f32 %v926, %v944
        %v946 = vpack.c.bf16 %v945, %v945
        %v947 = vpack.c.bf16 %v927, %v927
        %v948 = vpack.c.bf16 %v928, %v928
        %v949 = vpack.c.bf16 %v929, %v929
        %v950 = vpack.c.bf16 %v930, %v930
        %v951 = vpack.c.bf16 %v931, %v931
        %v952 = vpack.c.bf16 %v932, %v932
        %v953 = vpack.c.bf16 %v933, %v933
        %v954 = vpack.c.bf16 %v934, %v934
        %v955 = vpack.c.bf16 %v935, %v935
        %v956 = vpack.c.bf16 %v936, %v936
        %v957 = vpack.c.bf16 %v937, %v937
        %v958 = vpack.c.bf16 %v938, %v938
        %v959 = vpack.c.bf16 %v939, %v939
        %v960 = vpack.c.bf16 %v940, %v940
        %v961 = vpack.c.bf16 %v941, %v941
        %v962 = vpack.c.bf16 %v942, %v942
        %v963 = vunpack.c.l.bf16 %v947
        %v964 = vunpack.c.l.bf16 %v948
        %v965 = vunpack.c.l.bf16 %v949
        %v966 = vunpack.c.l.bf16 %v950
        %v967 = vunpack.c.l.bf16 %v951
        %v968 = vunpack.c.l.bf16 %v952
        %v969 = vunpack.c.l.bf16 %v953
        %v970 = vunpack.c.l.bf16 %v954
        %v971 = vunpack.c.l.bf16 %v955
        %v972 = vunpack.c.l.bf16 %v956
        %v973 = vunpack.c.l.bf16 %v957
        %v974 = vunpack.c.l.bf16 %v958
        %v975 = vunpack.c.l.bf16 %v959
        %v976 = vunpack.c.l.bf16 %v960
        %v977 = vunpack.c.l.bf16 %v961
        %v978 = vunpack.c.l.bf16 %v962
        %v979 = vsub.f32 %v927, %v963
        %v980 = vsub.f32 %v928, %v964
        %v981 = vsub.f32 %v929, %v965
        %v982 = vsub.f32 %v930, %v966
        %v983 = vsub.f32 %v931, %v967
        %v984 = vsub.f32 %v932, %v968
        %v985 = vsub.f32 %v933, %v969
        %v986 = vsub.f32 %v934, %v970
        %v987 = vsub.f32 %v935, %v971
        %v988 = vsub.f32 %v936, %v972
        %v989 = vsub.f32 %v937, %v973
        %v990 = vsub.f32 %v938, %v974
        %v991 = vsub.f32 %v939, %v975
        %v992 = vsub.f32 %v940, %v976
        %v993 = vsub.f32 %v941, %v977
        %v994 = vsub.f32 %v942, %v978
        %v995 = vpack.c.bf16 %v980, %v979
        %v996 = vpack.c.bf16 %v982, %v981
        %v997 = vpack.c.bf16 %v984, %v983
        %v998 = vpack.c.bf16 %v986, %v985
        %v999 = vpack.c.bf16 %v988, %v987
        %v1000 = vpack.c.bf16 %v990, %v989
        %v1001 = vpack.c.bf16 %v992, %v991
        %v1002 = vpack.c.bf16 %v994, %v993
        %1003 = vmatpush.bf16.msra.mxu0 %v1002
        %1004 = vmatpush.bf16.msra.mxu0 %v1001
        %1005 = vmatpush.bf16.msra.mxu0 %v1000
        %1006 = vmatpush.bf16.msra.mxu0 %v999
        %1007 = vmatpush.bf16.msra.mxu0 %v998
        %1008 = vmatpush.bf16.msra.mxu0 %v997
        %1009 = vmatpush.bf16.msra.mxu0 %v996
        %1010 = vmatpush.bf16.msra.mxu0 %v995
        %1011 = vmatmul.bf16.gmra.mxu0 %v943
        %v1012 = vpop.f32.mrf.mxu0
        %v1013 = vadd.f32 0.0, %v1012
        %v1014 = vpop.f32.mrf.mxu0
        %1015 = vdwg.mxu0
        %v1032 = vunpack.c.l.b16 %v947
        %v1033 = vunpack.c.l.b16 %v948
        %v1034 = vunpack.c.l.b16 %v949
        %v1035 = vunpack.c.l.b16 %v950
        %v1036 = vunpack.c.l.b16 %v951
        %v1037 = vunpack.c.l.b16 %v952
        %v1038 = vunpack.c.l.b16 %v953
        %v1039 = vunpack.c.l.b16 %v954
        %v1040 = vunpack.c.l.b16 %v955
        %v1041 = vunpack.c.l.b16 %v956
        %v1042 = vunpack.c.l.b16 %v957
        %v1043 = vunpack.c.l.b16 %v958
        %v1044 = vunpack.c.l.b16 %v959
        %v1045 = vunpack.c.l.b16 %v960
        %v1046 = vunpack.c.l.b16 %v961
        %v1047 = vunpack.c.l.b16 %v962
        %v1048 = vpack.c.b16 %v1033, %v1032
        %v1049 = vpack.c.b16 %v1035, %v1034
        %v1050 = vpack.c.b16 %v1037, %v1036
        %v1051 = vpack.c.b16 %v1039, %v1038
        %v1052 = vpack.c.b16 %v1041, %v1040
        %v1053 = vpack.c.b16 %v1043, %v1042
        %v1054 = vpack.c.b16 %v1045, %v1044
        %v1055 = vpack.c.b16 %v1047, %v1046
        %1064 = vmatpush.bf16.msra.mxu0 %v1055
        %1065 = vmatpush.bf16.msra.mxu0 %v1054
        %1066 = vmatpush.bf16.msra.mxu0 %v1053
        %1067 = vmatpush.bf16.msra.mxu0 %v1052
        %1068 = vmatpush.bf16.msra.mxu0 %v1051
        %1069 = vmatpush.bf16.msra.mxu0 %v1050
        %1070 = vmatpush.bf16.msra.mxu0 %v1049
        %1071 = vmatpush.bf16.msra.mxu0 %v1048
        %1072 = vmatmul.bf16.gmra.mxu0 %v943
        %v1073 = vpop.f32.mrf.mxu0
        %v1074 = vadd.f32 %v1013, %v1073
        %v1075 = vpop.f32.mrf.mxu0
        %1076 = vdwg.mxu0
        %1077 = vmatpush.bf16.msra.mxu0 %v1055
        %1078 = vmatpush.bf16.msra.mxu0 %v1054
        %1079 = vmatpush.bf16.msra.mxu0 %v1053
        %1080 = vmatpush.bf16.msra.mxu0 %v1052
        %1081 = vmatpush.bf16.msra.mxu0 %v1051
        %1082 = vmatpush.bf16.msra.mxu0 %v1050
        %1083 = vmatpush.bf16.msra.mxu0 %v1049
        %1084 = vmatpush.bf16.msra.mxu0 %v1048
        %1085 = vmatmul.bf16.gmra.mxu0 %v946
        %v1086 = vpop.f32.mrf.mxu0
        %v1087 = vadd.f32 0.0, %v1086
        %v1088 = vpop.f32.mrf.mxu0
        %1089 = vdwg.mxu0
        %v1090 = vadd.f32 %v1074, %v1087
        %v1091 = vld [vmem:[%s3] sm:$0x1]
        %v1093 = vperm.slane %v1091, 0
        %v1095 = vadd.f32 %v1090, %v1093
        %v1096 = vadd.f32 %v1095, %v352
        %1097 = vadd.xlane.f32.xlu0 %v1096
        %v1098 = vpop.xlane.xlu0 %1097
        %v1099 = vrcp.pop 128.0
        %v1100 = vmul.f32 128.0, %v1099
        %v1101 = vsub.f32 1.0, %v1100
        %v1102 = vmul.f32 %v1099, %v1101
        %v1103 = vadd.f32 %v1099, %v1102
        %vm1104 = vweird.f32 %v1099
        %v1105 = vsel %vm1104, %v1099, %v1103
        %v1106 = vmul.f32 %v1098, %v1105
        %v1107 = vsub.f32 %v1096, %v1106
        %v1108 = vmul.f32 %v1107, %v1107
        %1109 = vadd.xlane.f32.xlu0 %v1108
        %v1110 = vpop.xlane.xlu0 %1109
        %v1111 = vmul.f32 %v1110, 0.007874016
        %v1112 = vrcp.pop %v1111
        %v1113 = vmul.f32 %v1111, %v1112
        %v1114 = vsub.f32 1.0, %v1113
        %v1115 = vmul.f32 %v1112, %v1114
        %v1116 = vadd.f32 %v1112, %v1115
        %vm1117 = vweird.f32 %v1111
        %vm1118 = vweird.f32 %v1112
        %vm1119 = vmor %vm1117, %vm1118
        %v1120 = vsel %vm1119, %v1112, %v1116
        %v1121 = vand.u32 2147483647, %v1111
        %vm1122 = vcmp.eq.f32.partialorder %v1121, 8.507059e+37
        %v1123 = vand.u32 %v1111, 2147483648
        %v1124 = vor.u32 1.1754944e-38, %v1123
        %v1125 = vsel %vm1122, %v1124, %v1120
        %v1126 = vmul.f32 %v1107, %v1125
        %v1127 = vld [vmem:[#allocation5] sm:$0xff]
        %v1128 = vld [vmem:[#allocation5 + $0x8] sm:$0xff]
        %v1129 = vld [vmem:[#allocation5 + $0x10] sm:$0xff]
        %v1130 = vld [vmem:[#allocation5 + $0x18] sm:$0xff]
        %v1131 = vld [vmem:[#allocation5 + $0x20] sm:$0xff]
        %v1132 = vld [vmem:[#allocation5 + $0x28] sm:$0xff]
        %v1133 = vld [vmem:[#allocation5 + $0x30] sm:$0xff]
        %v1134 = vld [vmem:[#allocation5 + $0x38] sm:$0xff]
        %v1135 = vld [vmem:[#allocation5 + $0x40] sm:$0xff]
        %v1136 = vld [vmem:[#allocation5 + $0x48] sm:$0xff]
        %v1137 = vld [vmem:[#allocation5 + $0x50] sm:$0xff]
        %v1138 = vld [vmem:[#allocation5 + $0x58] sm:$0xff]
        %v1139 = vld [vmem:[#allocation5 + $0x60] sm:$0xff]
        %v1140 = vld [vmem:[#allocation5 + $0x68] sm:$0xff]
        %v1141 = vld [vmem:[#allocation5 + $0x70] sm:$0xff]
        %v1142 = vld [vmem:[#allocation5 + $0x78] sm:$0xff]
        %v1143 = vld [vmem:[#allocation5 + $0x80] sm:$0xff]
        %v1144 = vld [vmem:[#allocation5 + $0x88] sm:$0xff]
        %v1145 = vld [vmem:[#allocation5 + $0x90] sm:$0xff]
        %v1146 = vld [vmem:[#allocation5 + $0x98] sm:$0xff]
        %v1147 = vld [vmem:[#allocation5 + $0xa0] sm:$0xff]
        %v1148 = vld [vmem:[#allocation5 + $0xa8] sm:$0xff]
        %v1149 = vld [vmem:[#allocation5 + $0xb0] sm:$0xff]
        %v1150 = vld [vmem:[#allocation5 + $0xb8] sm:$0xff]
        %v1151 = vld [vmem:[#allocation5 + $0xc0] sm:$0xff]
        %v1152 = vld [vmem:[#allocation5 + $0xc8] sm:$0xff]
        %v1153 = vld [vmem:[#allocation5 + $0xd0] sm:$0xff]
        %v1154 = vld [vmem:[#allocation5 + $0xd8] sm:$0xff]
        %v1155 = vld [vmem:[#allocation5 + $0xe0] sm:$0xff]
        %v1156 = vld [vmem:[#allocation5 + $0xe8] sm:$0xff]
        %v1157 = vld [vmem:[#allocation5 + $0xf0] sm:$0xff]
        %v1158 = vld [vmem:[#allocation5 + $0xf8] sm:$0xff]
        %v1159 = vld [vmem:[#allocation5 + $0x100] sm:$0xff]
        %v1160 = vld [vmem:[#allocation5 + $0x108] sm:$0xff]
        %v1161 = vld [vmem:[#allocation5 + $0x110] sm:$0xff]
        %v1162 = vld [vmem:[#allocation5 + $0x118] sm:$0xff]
        %v1163 = vld [vmem:[#allocation5 + $0x120] sm:$0xff]
        %v1164 = vld [vmem:[#allocation5 + $0x128] sm:$0xff]
        %v1165 = vld [vmem:[#allocation5 + $0x130] sm:$0xff]
        %v1166 = vld [vmem:[#allocation5 + $0x138] sm:$0xff]
        %v1167 = vld [vmem:[#allocation5 + $0x140] sm:$0xff]
        %v1168 = vld [vmem:[#allocation5 + $0x148] sm:$0xff]
        %v1169 = vld [vmem:[#allocation5 + $0x150] sm:$0xff]
        %v1170 = vld [vmem:[#allocation5 + $0x158] sm:$0xff]
        %v1171 = vld [vmem:[#allocation5 + $0x160] sm:$0xff]
        %v1172 = vld [vmem:[#allocation5 + $0x168] sm:$0xff]
        %v1173 = vld [vmem:[#allocation5 + $0x170] sm:$0xff]
        %v1174 = vld [vmem:[#allocation5 + $0x178] sm:$0xff]
        %v1175 = vld [vmem:[#allocation5 + $0x180] sm:$0xff]
        %v1176 = vld [vmem:[#allocation5 + $0x188] sm:$0xff]
        %v1177 = vld [vmem:[#allocation5 + $0x190] sm:$0xff]
        %v1178 = vld [vmem:[#allocation5 + $0x198] sm:$0xff]
        %v1179 = vld [vmem:[#allocation5 + $0x1a0] sm:$0xff]
        %v1180 = vld [vmem:[#allocation5 + $0x1a8] sm:$0xff]
        %v1181 = vld [vmem:[#allocation5 + $0x1b0] sm:$0xff]
        %v1182 = vld [vmem:[#allocation5 + $0x1b8] sm:$0xff]
        %v1183 = vld [vmem:[#allocation5 + $0x1c0] sm:$0xff]
        %v1184 = vld [vmem:[#allocation5 + $0x1c8] sm:$0xff]
        %v1185 = vld [vmem:[#allocation5 + $0x1d0] sm:$0xff]
        %v1186 = vld [vmem:[#allocation5 + $0x1d8] sm:$0xff]
        %v1187 = vld [vmem:[#allocation5 + $0x1e0] sm:$0xff]
        %v1188 = vld [vmem:[#allocation5 + $0x1e8] sm:$0xff]
        %v1189 = vld [vmem:[#allocation5 + $0x1f0] sm:$0xff]
        %v1190 = vld [vmem:[#allocation5 + $0x1f8] sm:$0xff]
        %v1191 = vpack.c.bf16 %v1126, %v1126
        %v1192 = vunpack.c.l.bf16 %v1191
        %v1193 = vsub.f32 %v1126, %v1192
        %v1194 = vpack.c.bf16 %v1193, %v1193
        %v1195 = vpack.c.bf16 %v1128, %v1127
        %v1196 = vpack.c.bf16 %v1130, %v1129
        %v1197 = vpack.c.bf16 %v1132, %v1131
        %v1198 = vpack.c.bf16 %v1134, %v1133
        %v1199 = vpack.c.bf16 %v1136, %v1135
        %v1200 = vpack.c.bf16 %v1138, %v1137
        %v1201 = vpack.c.bf16 %v1140, %v1139
        %v1202 = vpack.c.bf16 %v1142, %v1141
        %v1203 = vpack.c.bf16 %v1144, %v1143
        %v1204 = vpack.c.bf16 %v1146, %v1145
        %v1205 = vpack.c.bf16 %v1148, %v1147
        %v1206 = vpack.c.bf16 %v1150, %v1149
        %v1207 = vpack.c.bf16 %v1152, %v1151
        %v1208 = vpack.c.bf16 %v1154, %v1153
        %v1209 = vpack.c.bf16 %v1156, %v1155
        %v1210 = vpack.c.bf16 %v1158, %v1157
        %v1211 = vpack.c.bf16 %v1160, %v1159
        %v1212 = vpack.c.bf16 %v1162, %v1161
        %v1213 = vpack.c.bf16 %v1164, %v1163
        %v1214 = vpack.c.bf16 %v1166, %v1165
        %v1215 = vpack.c.bf16 %v1168, %v1167
        %v1216 = vpack.c.bf16 %v1170, %v1169
        %v1217 = vpack.c.bf16 %v1172, %v1171
        %v1218 = vpack.c.bf16 %v1174, %v1173
        %v1219 = vpack.c.bf16 %v1176, %v1175
        %v1220 = vpack.c.bf16 %v1178, %v1177
        %v1221 = vpack.c.bf16 %v1180, %v1179
        %v1222 = vpack.c.bf16 %v1182, %v1181
        %v1223 = vpack.c.bf16 %v1184, %v1183
        %v1224 = vpack.c.bf16 %v1186, %v1185
        %v1225 = vpack.c.bf16 %v1188, %v1187
        %v1226 = vpack.c.bf16 %v1190, %v1189
        %v1227 = vunpack.c.l.bf16 %v1195
        %v1228 = vunpack.c.h.bf16 %v1195
        %v1229 = vunpack.c.l.bf16 %v1196
        %v1230 = vunpack.c.h.bf16 %v1196
        %v1231 = vunpack.c.l.bf16 %v1197
        %v1232 = vunpack.c.h.bf16 %v1197
        %v1233 = vunpack.c.l.bf16 %v1198
        %v1234 = vunpack.c.h.bf16 %v1198
        %v1235 = vunpack.c.l.bf16 %v1199
        %v1236 = vunpack.c.h.bf16 %v1199
        %v1237 = vunpack.c.l.bf16 %v1200
        %v1238 = vunpack.c.h.bf16 %v1200
        %v1239 = vunpack.c.l.bf16 %v1201
        %v1240 = vunpack.c.h.bf16 %v1201
        %v1241 = vunpack.c.l.bf16 %v1202
        %v1242 = vunpack.c.h.bf16 %v1202
        %v1243 = vunpack.c.l.bf16 %v1203
        %v1244 = vunpack.c.h.bf16 %v1203
        %v1245 = vunpack.c.l.bf16 %v1204
        %v1246 = vunpack.c.h.bf16 %v1204
        %v1247 = vunpack.c.l.bf16 %v1205
        %v1248 = vunpack.c.h.bf16 %v1205
        %v1249 = vunpack.c.l.bf16 %v1206
        %v1250 = vunpack.c.h.bf16 %v1206
        %v1251 = vunpack.c.l.bf16 %v1207
        %v1252 = vunpack.c.h.bf16 %v1207
        %v1253 = vunpack.c.l.bf16 %v1208
        %v1254 = vunpack.c.h.bf16 %v1208
        %v1255 = vunpack.c.l.bf16 %v1209
        %v1256 = vunpack.c.h.bf16 %v1209
        %v1257 = vunpack.c.l.bf16 %v1210
        %v1258 = vunpack.c.h.bf16 %v1210
        %v1259 = vunpack.c.l.bf16 %v1211
        %v1260 = vunpack.c.h.bf16 %v1211
        %v1261 = vunpack.c.l.bf16 %v1212
        %v1262 = vunpack.c.h.bf16 %v1212
        %v1263 = vunpack.c.l.bf16 %v1213
        %v1264 = vunpack.c.h.bf16 %v1213
        %v1265 = vunpack.c.l.bf16 %v1214
        %v1266 = vunpack.c.h.bf16 %v1214
        %v1267 = vunpack.c.l.bf16 %v1215
        %v1268 = vunpack.c.h.bf16 %v1215
        %v1269 = vunpack.c.l.bf16 %v1216
        %v1270 = vunpack.c.h.bf16 %v1216
        %v1271 = vunpack.c.l.bf16 %v1217
        %v1272 = vunpack.c.h.bf16 %v1217
        %v1273 = vunpack.c.l.bf16 %v1218
        %v1274 = vunpack.c.h.bf16 %v1218
        %v1275 = vunpack.c.l.bf16 %v1219
        %v1276 = vunpack.c.h.bf16 %v1219
        %v1277 = vunpack.c.l.bf16 %v1220
        %v1278 = vunpack.c.h.bf16 %v1220
        %v1279 = vunpack.c.l.bf16 %v1221
        %v1280 = vunpack.c.h.bf16 %v1221
        %v1281 = vunpack.c.l.bf16 %v1222
        %v1282 = vunpack.c.h.bf16 %v1222
        %v1283 = vunpack.c.l.bf16 %v1223
        %v1284 = vunpack.c.h.bf16 %v1223
        %v1285 = vunpack.c.l.bf16 %v1224
        %v1286 = vunpack.c.h.bf16 %v1224
        %v1287 = vunpack.c.l.bf16 %v1225
        %v1288 = vunpack.c.h.bf16 %v1225
        %v1289 = vunpack.c.l.bf16 %v1226
        %v1290 = vunpack.c.h.bf16 %v1226
        %v1291 = vsub.f32 %v1127, %v1227
        %v1292 = vsub.f32 %v1128, %v1228
        %v1293 = vsub.f32 %v1129, %v1229
        %v1294 = vsub.f32 %v1130, %v1230
        %v1295 = vsub.f32 %v1131, %v1231
        %v1296 = vsub.f32 %v1132, %v1232
        %v1297 = vsub.f32 %v1133, %v1233
        %v1298 = vsub.f32 %v1134, %v1234
        %v1299 = vsub.f32 %v1135, %v1235
        %v1300 = vsub.f32 %v1136, %v1236
        %v1301 = vsub.f32 %v1137, %v1237
        %v1302 = vsub.f32 %v1138, %v1238
        %v1303 = vsub.f32 %v1139, %v1239
        %v1304 = vsub.f32 %v1140, %v1240
        %v1305 = vsub.f32 %v1141, %v1241
        %v1306 = vsub.f32 %v1142, %v1242
        %v1307 = vsub.f32 %v1143, %v1243
        %v1308 = vsub.f32 %v1144, %v1244
        %v1309 = vsub.f32 %v1145, %v1245
        %v1310 = vsub.f32 %v1146, %v1246
        %v1311 = vsub.f32 %v1147, %v1247
        %v1312 = vsub.f32 %v1148, %v1248
        %v1313 = vsub.f32 %v1149, %v1249
        %v1314 = vsub.f32 %v1150, %v1250
        %v1315 = vsub.f32 %v1151, %v1251
        %v1316 = vsub.f32 %v1152, %v1252
        %v1317 = vsub.f32 %v1153, %v1253
        %v1318 = vsub.f32 %v1154, %v1254
        %v1319 = vsub.f32 %v1155, %v1255
        %v1320 = vsub.f32 %v1156, %v1256
        %v1321 = vsub.f32 %v1157, %v1257
        %v1322 = vsub.f32 %v1158, %v1258
        %v1323 = vsub.f32 %v1159, %v1259
        %v1324 = vsub.f32 %v1160, %v1260
        %v1325 = vsub.f32 %v1161, %v1261
        %v1326 = vsub.f32 %v1162, %v1262
        %v1327 = vsub.f32 %v1163, %v1263
        %v1328 = vsub.f32 %v1164, %v1264
        %v1329 = vsub.f32 %v1165, %v1265
        %v1330 = vsub.f32 %v1166, %v1266
        %v1331 = vsub.f32 %v1167, %v1267
        %v1332 = vsub.f32 %v1168, %v1268
        %v1333 = vsub.f32 %v1169, %v1269
        %v1334 = vsub.f32 %v1170, %v1270
        %v1335 = vsub.f32 %v1171, %v1271
        %v1336 = vsub.f32 %v1172, %v1272
        %v1337 = vsub.f32 %v1173, %v1273
        %v1338 = vsub.f32 %v1174, %v1274
        %v1339 = vsub.f32 %v1175, %v1275
        %v1340 = vsub.f32 %v1176, %v1276
        %v1341 = vsub.f32 %v1177, %v1277
        %v1342 = vsub.f32 %v1178, %v1278
        %v1343 = vsub.f32 %v1179, %v1279
        %v1344 = vsub.f32 %v1180, %v1280
        %v1345 = vsub.f32 %v1181, %v1281
        %v1346 = vsub.f32 %v1182, %v1282
        %v1347 = vsub.f32 %v1183, %v1283
        %v1348 = vsub.f32 %v1184, %v1284
        %v1349 = vsub.f32 %v1185, %v1285
        %v1350 = vsub.f32 %v1186, %v1286
        %v1351 = vsub.f32 %v1187, %v1287
        %v1352 = vsub.f32 %v1188, %v1288
        %v1353 = vsub.f32 %v1189, %v1289
        %v1354 = vsub.f32 %v1190, %v1290
        %v1355 = vpack.c.bf16 %v1295, %v1291
        %v1356 = vpack.c.bf16 %v1296, %v1292
        %v1357 = vpack.c.bf16 %v1297, %v1293
        %v1358 = vpack.c.bf16 %v1298, %v1294
        %v1359 = vpack.c.bf16 %v1303, %v1299
        %v1360 = vpack.c.bf16 %v1304, %v1300
        %v1361 = vpack.c.bf16 %v1305, %v1301
        %v1362 = vpack.c.bf16 %v1306, %v1302
        %v1363 = vpack.c.bf16 %v1311, %v1307
        %v1364 = vpack.c.bf16 %v1312, %v1308
        %v1365 = vpack.c.bf16 %v1313, %v1309
        %v1366 = vpack.c.bf16 %v1314, %v1310
        %v1367 = vpack.c.bf16 %v1319, %v1315
        %v1368 = vpack.c.bf16 %v1320, %v1316
        %v1369 = vpack.c.bf16 %v1321, %v1317
        %v1370 = vpack.c.bf16 %v1322, %v1318
        %v1371 = vpack.c.bf16 %v1327, %v1323
        %v1372 = vpack.c.bf16 %v1328, %v1324
        %v1373 = vpack.c.bf16 %v1329, %v1325
        %v1374 = vpack.c.bf16 %v1330, %v1326
        %v1375 = vpack.c.bf16 %v1335, %v1331
        %v1376 = vpack.c.bf16 %v1336, %v1332
        %v1377 = vpack.c.bf16 %v1337, %v1333
        %v1378 = vpack.c.bf16 %v1338, %v1334
        %v1379 = vpack.c.bf16 %v1343, %v1339
        %v1380 = vpack.c.bf16 %v1344, %v1340
        %v1381 = vpack.c.bf16 %v1345, %v1341
        %v1382 = vpack.c.bf16 %v1346, %v1342
        %v1383 = vpack.c.bf16 %v1351, %v1347
        %v1384 = vpack.c.bf16 %v1352, %v1348
        %v1385 = vpack.c.bf16 %v1353, %v1349
        %v1386 = vpack.c.bf16 %v1354, %v1350
        %1387 = vmatpush.bf16.msra.mxu0 %v1383
        %1388 = vmatpush.bf16.msra.mxu0 %v1379
        %1389 = vmatpush.bf16.msra.mxu0 %v1375
        %1390 = vmatpush.bf16.msra.mxu0 %v1371
        %1391 = vmatpush.bf16.msra.mxu0 %v1367
        %1392 = vmatpush.bf16.msra.mxu0 %v1363
        %1393 = vmatpush.bf16.msra.mxu0 %v1359
        %1394 = vmatpush.bf16.msra.mxu0 %v1355
        %1395 = vmatmul.bf16.gmra.mxu0 %v1191
        %v1396 = vpop.f32.mrf.mxu0
        %v1397 = vadd.f32 0.0, %v1396
        %v1398 = vpop.f32.mrf.mxu0
        %1399 = vdwg.mxu0
        %1400 = vmatpush.bf16.msra.mxu0 %v1384
        %1401 = vmatpush.bf16.msra.mxu0 %v1380
        %1402 = vmatpush.bf16.msra.mxu0 %v1376
        %1403 = vmatpush.bf16.msra.mxu0 %v1372
        %1404 = vmatpush.bf16.msra.mxu0 %v1368
        %1405 = vmatpush.bf16.msra.mxu0 %v1364
        %1406 = vmatpush.bf16.msra.mxu0 %v1360
        %1407 = vmatpush.bf16.msra.mxu0 %v1356
        %1408 = vmatmul.bf16.gmra.mxu0 %v1191
        %v1409 = vpop.f32.mrf.mxu0
        %v1410 = vadd.f32 0.0, %v1409
        %v1411 = vpop.f32.mrf.mxu0
        %1412 = vdwg.mxu0
        %1413 = vmatpush.bf16.msra.mxu0 %v1385
        %1414 = vmatpush.bf16.msra.mxu0 %v1381
        %1415 = vmatpush.bf16.msra.mxu0 %v1377
        %1416 = vmatpush.bf16.msra.mxu0 %v1373
        %1417 = vmatpush.bf16.msra.mxu0 %v1369
        %1418 = vmatpush.bf16.msra.mxu0 %v1365
        %1419 = vmatpush.bf16.msra.mxu0 %v1361
        %1420 = vmatpush.bf16.msra.mxu0 %v1357
        %1421 = vmatmul.bf16.gmra.mxu0 %v1191
        %v1422 = vpop.f32.mrf.mxu0
        %v1423 = vadd.f32 0.0, %v1422
        %v1424 = vpop.f32.mrf.mxu0
        %1425 = vdwg.mxu0
        %1426 = vmatpush.bf16.msra.mxu0 %v1386
        %1427 = vmatpush.bf16.msra.mxu0 %v1382
        %1428 = vmatpush.bf16.msra.mxu0 %v1378
        %1429 = vmatpush.bf16.msra.mxu0 %v1374
        %1430 = vmatpush.bf16.msra.mxu0 %v1370
        %1431 = vmatpush.bf16.msra.mxu0 %v1366
        %1432 = vmatpush.bf16.msra.mxu0 %v1362
        %1433 = vmatpush.bf16.msra.mxu0 %v1358
        %1434 = vmatmul.bf16.gmra.mxu0 %v1191
        %v1435 = vpop.f32.mrf.mxu0
        %v1436 = vadd.f32 0.0, %v1435
        %v1437 = vpop.f32.mrf.mxu0
        %1438 = vdwg.mxu0
        %v1471 = vunpack.c.l.b16 %v1195
        %v1472 = vunpack.c.h.b16 %v1195
        %v1473 = vunpack.c.l.b16 %v1196
        %v1474 = vunpack.c.h.b16 %v1196
        %v1475 = vunpack.c.l.b16 %v1197
        %v1476 = vunpack.c.h.b16 %v1197
        %v1477 = vunpack.c.l.b16 %v1198
        %v1478 = vunpack.c.h.b16 %v1198
        %v1479 = vunpack.c.l.b16 %v1199
        %v1480 = vunpack.c.h.b16 %v1199
        %v1481 = vunpack.c.l.b16 %v1200
        %v1482 = vunpack.c.h.b16 %v1200
        %v1483 = vunpack.c.l.b16 %v1201
        %v1484 = vunpack.c.h.b16 %v1201
        %v1485 = vunpack.c.l.b16 %v1202
        %v1486 = vunpack.c.h.b16 %v1202
        %v1487 = vunpack.c.l.b16 %v1203
        %v1488 = vunpack.c.h.b16 %v1203
        %v1489 = vunpack.c.l.b16 %v1204
        %v1490 = vunpack.c.h.b16 %v1204
        %v1491 = vunpack.c.l.b16 %v1205
        %v1492 = vunpack.c.h.b16 %v1205
        %v1493 = vunpack.c.l.b16 %v1206
        %v1494 = vunpack.c.h.b16 %v1206
        %v1495 = vunpack.c.l.b16 %v1207
        %v1496 = vunpack.c.h.b16 %v1207
        %v1497 = vunpack.c.l.b16 %v1208
        %v1498 = vunpack.c.h.b16 %v1208
        %v1499 = vunpack.c.l.b16 %v1209
        %v1500 = vunpack.c.h.b16 %v1209
        %v1501 = vunpack.c.l.b16 %v1210
        %v1502 = vunpack.c.h.b16 %v1210
        %v1503 = vunpack.c.l.b16 %v1211
        %v1504 = vunpack.c.h.b16 %v1211
        %v1505 = vunpack.c.l.b16 %v1212
        %v1506 = vunpack.c.h.b16 %v1212
        %v1507 = vunpack.c.l.b16 %v1213
        %v1508 = vunpack.c.h.b16 %v1213
        %v1509 = vunpack.c.l.b16 %v1214
        %v1510 = vunpack.c.h.b16 %v1214
        %v1511 = vunpack.c.l.b16 %v1215
        %v1512 = vunpack.c.h.b16 %v1215
        %v1513 = vunpack.c.l.b16 %v1216
        %v1514 = vunpack.c.h.b16 %v1216
        %v1515 = vunpack.c.l.b16 %v1217
        %v1516 = vunpack.c.h.b16 %v1217
        %v1517 = vunpack.c.l.b16 %v1218
        %v1518 = vunpack.c.h.b16 %v1218
        %v1519 = vunpack.c.l.b16 %v1219
        %v1520 = vunpack.c.h.b16 %v1219
        %v1521 = vunpack.c.l.b16 %v1220
        %v1522 = vunpack.c.h.b16 %v1220
        %v1523 = vunpack.c.l.b16 %v1221
        %v1524 = vunpack.c.h.b16 %v1221
        %v1525 = vunpack.c.l.b16 %v1222
        %v1526 = vunpack.c.h.b16 %v1222
        %v1527 = vunpack.c.l.b16 %v1223
        %v1528 = vunpack.c.h.b16 %v1223
        %v1529 = vunpack.c.l.b16 %v1224
        %v1530 = vunpack.c.h.b16 %v1224
        %v1531 = vunpack.c.l.b16 %v1225
        %v1532 = vunpack.c.h.b16 %v1225
        %v1533 = vunpack.c.l.b16 %v1226
        %v1534 = vunpack.c.h.b16 %v1226
        %v1535 = vpack.c.b16 %v1475, %v1471
        %v1536 = vpack.c.b16 %v1476, %v1472
        %v1537 = vpack.c.b16 %v1477, %v1473
        %v1538 = vpack.c.b16 %v1478, %v1474
        %v1539 = vpack.c.b16 %v1483, %v1479
        %v1540 = vpack.c.b16 %v1484, %v1480
        %v1541 = vpack.c.b16 %v1485, %v1481
        %v1542 = vpack.c.b16 %v1486, %v1482
        %v1543 = vpack.c.b16 %v1491, %v1487
        %v1544 = vpack.c.b16 %v1492, %v1488
        %v1545 = vpack.c.b16 %v1493, %v1489
        %v1546 = vpack.c.b16 %v1494, %v1490
        %v1547 = vpack.c.b16 %v1499, %v1495
        %v1548 = vpack.c.b16 %v1500, %v1496
        %v1549 = vpack.c.b16 %v1501, %v1497
        %v1550 = vpack.c.b16 %v1502, %v1498
        %v1551 = vpack.c.b16 %v1507, %v1503
        %v1552 = vpack.c.b16 %v1508, %v1504
        %v1553 = vpack.c.b16 %v1509, %v1505
        %v1554 = vpack.c.b16 %v1510, %v1506
        %v1555 = vpack.c.b16 %v1515, %v1511
        %v1556 = vpack.c.b16 %v1516, %v1512
        %v1557 = vpack.c.b16 %v1517, %v1513
        %v1558 = vpack.c.b16 %v1518, %v1514
        %v1559 = vpack.c.b16 %v1523, %v1519
        %v1560 = vpack.c.b16 %v1524, %v1520
        %v1561 = vpack.c.b16 %v1525, %v1521
        %v1562 = vpack.c.b16 %v1526, %v1522
        %v1563 = vpack.c.b16 %v1531, %v1527
        %v1564 = vpack.c.b16 %v1532, %v1528
        %v1565 = vpack.c.b16 %v1533, %v1529
        %v1566 = vpack.c.b16 %v1534, %v1530
        %1599 = vmatpush.bf16.msra.mxu0 %v1563
        %1600 = vmatpush.bf16.msra.mxu0 %v1559
        %1601 = vmatpush.bf16.msra.mxu0 %v1555
        %1602 = vmatpush.bf16.msra.mxu0 %v1551
        %1603 = vmatpush.bf16.msra.mxu0 %v1547
        %1604 = vmatpush.bf16.msra.mxu0 %v1543
        %1605 = vmatpush.bf16.msra.mxu0 %v1539
        %1606 = vmatpush.bf16.msra.mxu0 %v1535
        %1607 = vmatmul.bf16.gmra.mxu0 %v1191
        %v1608 = vpop.f32.mrf.mxu0
        %v1609 = vadd.f32 %v1397, %v1608
        %v1610 = vpop.f32.mrf.mxu0
        %1611 = vdwg.mxu0
        %1612 = vmatpush.bf16.msra.mxu0 %v1564
        %1613 = vmatpush.bf16.msra.mxu0 %v1560
        %1614 = vmatpush.bf16.msra.mxu0 %v1556
        %1615 = vmatpush.bf16.msra.mxu0 %v1552
        %1616 = vmatpush.bf16.msra.mxu0 %v1548
        %1617 = vmatpush.bf16.msra.mxu0 %v1544
        %1618 = vmatpush.bf16.msra.mxu0 %v1540
        %1619 = vmatpush.bf16.msra.mxu0 %v1536
        %1620 = vmatmul.bf16.gmra.mxu0 %v1191
        %v1621 = vpop.f32.mrf.mxu0
        %v1622 = vadd.f32 %v1410, %v1621
        %v1623 = vpop.f32.mrf.mxu0
        %1624 = vdwg.mxu0
        %1625 = vmatpush.bf16.msra.mxu0 %v1565
        %1626 = vmatpush.bf16.msra.mxu0 %v1561
        %1627 = vmatpush.bf16.msra.mxu0 %v1557
        %1628 = vmatpush.bf16.msra.mxu0 %v1553
        %1629 = vmatpush.bf16.msra.mxu0 %v1549
        %1630 = vmatpush.bf16.msra.mxu0 %v1545
        %1631 = vmatpush.bf16.msra.mxu0 %v1541
        %1632 = vmatpush.bf16.msra.mxu0 %v1537
        %1633 = vmatmul.bf16.gmra.mxu0 %v1191
        %v1634 = vpop.f32.mrf.mxu0
        %v1635 = vadd.f32 %v1423, %v1634
        %v1636 = vpop.f32.mrf.mxu0
        %1637 = vdwg.mxu0
        %1638 = vmatpush.bf16.msra.mxu0 %v1566
        %1639 = vmatpush.bf16.msra.mxu0 %v1562
        %1640 = vmatpush.bf16.msra.mxu0 %v1558
        %1641 = vmatpush.bf16.msra.mxu0 %v1554
        %1642 = vmatpush.bf16.msra.mxu0 %v1550
        %1643 = vmatpush.bf16.msra.mxu0 %v1546
        %1644 = vmatpush.bf16.msra.mxu0 %v1542
        %1645 = vmatpush.bf16.msra.mxu0 %v1538
        %1646 = vmatmul.bf16.gmra.mxu0 %v1191
        %v1647 = vpop.f32.mrf.mxu0
        %v1648 = vadd.f32 %v1436, %v1647
        %v1649 = vpop.f32.mrf.mxu0
        %1650 = vdwg.mxu0
        %1651 = vmatpush.bf16.msra.mxu0 %v1563
        %1652 = vmatpush.bf16.msra.mxu0 %v1559
        %1653 = vmatpush.bf16.msra.mxu0 %v1555
        %1654 = vmatpush.bf16.msra.mxu0 %v1551
        %1655 = vmatpush.bf16.msra.mxu0 %v1547
        %1656 = vmatpush.bf16.msra.mxu0 %v1543
        %1657 = vmatpush.bf16.msra.mxu0 %v1539
        %1658 = vmatpush.bf16.msra.mxu0 %v1535
        %1659 = vmatmul.bf16.gmra.mxu0 %v1194
        %v1660 = vpop.f32.mrf.mxu0
        %v1661 = vadd.f32 0.0, %v1660
        %v1662 = vpop.f32.mrf.mxu0
        %1663 = vdwg.mxu0
        %1664 = vmatpush.bf16.msra.mxu0 %v1564
        %1665 = vmatpush.bf16.msra.mxu0 %v1560
        %1666 = vmatpush.bf16.msra.mxu0 %v1556
        %1667 = vmatpush.bf16.msra.mxu0 %v1552
        %1668 = vmatpush.bf16.msra.mxu0 %v1548
        %1669 = vmatpush.bf16.msra.mxu0 %v1544
        %1670 = vmatpush.bf16.msra.mxu0 %v1540
        %1671 = vmatpush.bf16.msra.mxu0 %v1536
        %1672 = vmatmul.bf16.gmra.mxu0 %v1194
        %v1673 = vpop.f32.mrf.mxu0
        %v1674 = vadd.f32 0.0, %v1673
        %v1675 = vpop.f32.mrf.mxu0
        %1676 = vdwg.mxu0
        %1677 = vmatpush.bf16.msra.mxu0 %v1565
        %1678 = vmatpush.bf16.msra.mxu0 %v1561
        %1679 = vmatpush.bf16.msra.mxu0 %v1557
        %1680 = vmatpush.bf16.msra.mxu0 %v1553
        %1681 = vmatpush.bf16.msra.mxu0 %v1549
        %1682 = vmatpush.bf16.msra.mxu0 %v1545
        %1683 = vmatpush.bf16.msra.mxu0 %v1541
        %1684 = vmatpush.bf16.msra.mxu0 %v1537
        %1685 = vmatmul.bf16.gmra.mxu0 %v1194
        %v1686 = vpop.f32.mrf.mxu0
        %v1687 = vadd.f32 0.0, %v1686
        %v1688 = vpop.f32.mrf.mxu0
        %1689 = vdwg.mxu0
        %1690 = vmatpush.bf16.msra.mxu0 %v1566
        %1691 = vmatpush.bf16.msra.mxu0 %v1562
        %1692 = vmatpush.bf16.msra.mxu0 %v1558
        %1693 = vmatpush.bf16.msra.mxu0 %v1554
        %1694 = vmatpush.bf16.msra.mxu0 %v1550
        %1695 = vmatpush.bf16.msra.mxu0 %v1546
        %1696 = vmatpush.bf16.msra.mxu0 %v1542
        %1697 = vmatpush.bf16.msra.mxu0 %v1538
        %1698 = vmatmul.bf16.gmra.mxu0 %v1194
        %v1699 = vpop.f32.mrf.mxu0
        %v1700 = vadd.f32 0.0, %v1699
        %v1701 = vpop.f32.mrf.mxu0
        %1702 = vdwg.mxu0
        %v1703 = vadd.f32 %v1609, %v1661
        %v1704 = vadd.f32 %v1622, %v1674
        %v1705 = vadd.f32 %v1635, %v1687
        %v1706 = vadd.f32 %v1648, %v1700
        %v1707 = vld [vmem:[%s5] sm:$0xf]
        %v1709 = vperm.slane %v1707, 0
        %v1710 = vperm.slane %v1707, 1
        %v1711 = vperm.slane %v1707, 2
        %v1712 = vperm.slane %v1707, 3
        %v1717 = vadd.f32 %v1703, %v1709
        %v1718 = vadd.f32 %v1704, %v1710
        %v1719 = vadd.f32 %v1705, %v1711
        %v1720 = vadd.f32 %v1706, %v1712
        %v1721 = vmax.f32 %v1717, 0.0
        %v1722 = vmax.f32 %v1718, 0.0
        %v1723 = vmax.f32 %v1719, 0.0
        %v1724 = vmax.f32 %v1720, 0.0
        %v1725 = vld [vmem:[#allocation7] sm:$0xff]
        %v1726 = vld [vmem:[#allocation7 + $0x8] sm:$0xff]
        %v1727 = vld [vmem:[#allocation7 + $0x10] sm:$0xff]
        %v1728 = vld [vmem:[#allocation7 + $0x18] sm:$0xff]
        %v1729 = vld [vmem:[#allocation7 + $0x20] sm:$0xff]
        %v1730 = vld [vmem:[#allocation7 + $0x28] sm:$0xff]
        %v1731 = vld [vmem:[#allocation7 + $0x30] sm:$0xff]
        %v1732 = vld [vmem:[#allocation7 + $0x38] sm:$0xff]
        %v1733 = vld [vmem:[#allocation7 + $0x40] sm:$0xff]
        %v1734 = vld [vmem:[#allocation7 + $0x48] sm:$0xff]
        %v1735 = vld [vmem:[#allocation7 + $0x50] sm:$0xff]
        %v1736 = vld [vmem:[#allocation7 + $0x58] sm:$0xff]
        %v1737 = vld [vmem:[#allocation7 + $0x60] sm:$0xff]
        %v1738 = vld [vmem:[#allocation7 + $0x68] sm:$0xff]
        %v1739 = vld [vmem:[#allocation7 + $0x70] sm:$0xff]
        %v1740 = vld [vmem:[#allocation7 + $0x78] sm:$0xff]
        %v1741 = vld [vmem:[#allocation7 + $0x80] sm:$0xff]
        %v1742 = vld [vmem:[#allocation7 + $0x88] sm:$0xff]
        %v1743 = vld [vmem:[#allocation7 + $0x90] sm:$0xff]
        %v1744 = vld [vmem:[#allocation7 + $0x98] sm:$0xff]
        %v1745 = vld [vmem:[#allocation7 + $0xa0] sm:$0xff]
        %v1746 = vld [vmem:[#allocation7 + $0xa8] sm:$0xff]
        %v1747 = vld [vmem:[#allocation7 + $0xb0] sm:$0xff]
        %v1748 = vld [vmem:[#allocation7 + $0xb8] sm:$0xff]
        %v1749 = vld [vmem:[#allocation7 + $0xc0] sm:$0xff]
        %v1750 = vld [vmem:[#allocation7 + $0xc8] sm:$0xff]
        %v1751 = vld [vmem:[#allocation7 + $0xd0] sm:$0xff]
        %v1752 = vld [vmem:[#allocation7 + $0xd8] sm:$0xff]
        %v1753 = vld [vmem:[#allocation7 + $0xe0] sm:$0xff]
        %v1754 = vld [vmem:[#allocation7 + $0xe8] sm:$0xff]
        %v1755 = vld [vmem:[#allocation7 + $0xf0] sm:$0xff]
        %v1756 = vld [vmem:[#allocation7 + $0xf8] sm:$0xff]
        %v1757 = vld [vmem:[#allocation7 + $0x100] sm:$0xff]
        %v1758 = vld [vmem:[#allocation7 + $0x108] sm:$0xff]
        %v1759 = vld [vmem:[#allocation7 + $0x110] sm:$0xff]
        %v1760 = vld [vmem:[#allocation7 + $0x118] sm:$0xff]
        %v1761 = vld [vmem:[#allocation7 + $0x120] sm:$0xff]
        %v1762 = vld [vmem:[#allocation7 + $0x128] sm:$0xff]
        %v1763 = vld [vmem:[#allocation7 + $0x130] sm:$0xff]
        %v1764 = vld [vmem:[#allocation7 + $0x138] sm:$0xff]
        %v1765 = vld [vmem:[#allocation7 + $0x140] sm:$0xff]
        %v1766 = vld [vmem:[#allocation7 + $0x148] sm:$0xff]
        %v1767 = vld [vmem:[#allocation7 + $0x150] sm:$0xff]
        %v1768 = vld [vmem:[#allocation7 + $0x158] sm:$0xff]
        %v1769 = vld [vmem:[#allocation7 + $0x160] sm:$0xff]
        %v1770 = vld [vmem:[#allocation7 + $0x168] sm:$0xff]
        %v1771 = vld [vmem:[#allocation7 + $0x170] sm:$0xff]
        %v1772 = vld [vmem:[#allocation7 + $0x178] sm:$0xff]
        %v1773 = vld [vmem:[#allocation7 + $0x180] sm:$0xff]
        %v1774 = vld [vmem:[#allocation7 + $0x188] sm:$0xff]
        %v1775 = vld [vmem:[#allocation7 + $0x190] sm:$0xff]
        %v1776 = vld [vmem:[#allocation7 + $0x198] sm:$0xff]
        %v1777 = vld [vmem:[#allocation7 + $0x1a0] sm:$0xff]
        %v1778 = vld [vmem:[#allocation7 + $0x1a8] sm:$0xff]
        %v1779 = vld [vmem:[#allocation7 + $0x1b0] sm:$0xff]
        %v1780 = vld [vmem:[#allocation7 + $0x1b8] sm:$0xff]
        %v1781 = vld [vmem:[#allocation7 + $0x1c0] sm:$0xff]
        %v1782 = vld [vmem:[#allocation7 + $0x1c8] sm:$0xff]
        %v1783 = vld [vmem:[#allocation7 + $0x1d0] sm:$0xff]
        %v1784 = vld [vmem:[#allocation7 + $0x1d8] sm:$0xff]
        %v1785 = vld [vmem:[#allocation7 + $0x1e0] sm:$0xff]
        %v1786 = vld [vmem:[#allocation7 + $0x1e8] sm:$0xff]
        %v1787 = vld [vmem:[#allocation7 + $0x1f0] sm:$0xff]
        %v1788 = vld [vmem:[#allocation7 + $0x1f8] sm:$0xff]
        %v1789 = vpack.c.bf16 %v1722, %v1721
        %v1790 = vpack.c.bf16 %v1724, %v1723
        %v1791 = vunpack.c.l.bf16 %v1789
        %v1792 = vunpack.c.h.bf16 %v1789
        %v1793 = vunpack.c.l.bf16 %v1790
        %v1794 = vunpack.c.h.bf16 %v1790
        %v1795 = vsub.f32 %v1721, %v1791
        %v1796 = vsub.f32 %v1722, %v1792
        %v1797 = vsub.f32 %v1723, %v1793
        %v1798 = vsub.f32 %v1724, %v1794
        %v1799 = vpack.c.bf16 %v1795, %v1795
        %v1800 = vpack.c.bf16 %v1796, %v1796
        %v1801 = vpack.c.bf16 %v1797, %v1797
        %v1802 = vpack.c.bf16 %v1798, %v1798
        %v1803 = vpack.c.bf16 %v1725, %v1725
        %v1804 = vpack.c.bf16 %v1726, %v1726
        %v1805 = vpack.c.bf16 %v1727, %v1727
        %v1806 = vpack.c.bf16 %v1728, %v1728
        %v1807 = vpack.c.bf16 %v1729, %v1729
        %v1808 = vpack.c.bf16 %v1730, %v1730
        %v1809 = vpack.c.bf16 %v1731, %v1731
        %v1810 = vpack.c.bf16 %v1732, %v1732
        %v1811 = vpack.c.bf16 %v1733, %v1733
        %v1812 = vpack.c.bf16 %v1734, %v1734
        %v1813 = vpack.c.bf16 %v1735, %v1735
        %v1814 = vpack.c.bf16 %v1736, %v1736
        %v1815 = vpack.c.bf16 %v1737, %v1737
        %v1816 = vpack.c.bf16 %v1738, %v1738
        %v1817 = vpack.c.bf16 %v1739, %v1739
        %v1818 = vpack.c.bf16 %v1740, %v1740
        %v1819 = vpack.c.bf16 %v1741, %v1741
        %v1820 = vpack.c.bf16 %v1742, %v1742
        %v1821 = vpack.c.bf16 %v1743, %v1743
        %v1822 = vpack.c.bf16 %v1744, %v1744
        %v1823 = vpack.c.bf16 %v1745, %v1745
        %v1824 = vpack.c.bf16 %v1746, %v1746
        %v1825 = vpack.c.bf16 %v1747, %v1747
        %v1826 = vpack.c.bf16 %v1748, %v1748
        %v1827 = vpack.c.bf16 %v1749, %v1749
        %v1828 = vpack.c.bf16 %v1750, %v1750
        %v1829 = vpack.c.bf16 %v1751, %v1751
        %v1830 = vpack.c.bf16 %v1752, %v1752
        %v1831 = vpack.c.bf16 %v1753, %v1753
        %v1832 = vpack.c.bf16 %v1754, %v1754
        %v1833 = vpack.c.bf16 %v1755, %v1755
        %v1834 = vpack.c.bf16 %v1756, %v1756
        %v1835 = vpack.c.bf16 %v1757, %v1757
        %v1836 = vpack.c.bf16 %v1758, %v1758
        %v1837 = vpack.c.bf16 %v1759, %v1759
        %v1838 = vpack.c.bf16 %v1760, %v1760
        %v1839 = vpack.c.bf16 %v1761, %v1761
        %v1840 = vpack.c.bf16 %v1762, %v1762
        %v1841 = vpack.c.bf16 %v1763, %v1763
        %v1842 = vpack.c.bf16 %v1764, %v1764
        %v1843 = vpack.c.bf16 %v1765, %v1765
        %v1844 = vpack.c.bf16 %v1766, %v1766
        %v1845 = vpack.c.bf16 %v1767, %v1767
        %v1846 = vpack.c.bf16 %v1768, %v1768
        %v1847 = vpack.c.bf16 %v1769, %v1769
        %v1848 = vpack.c.bf16 %v1770, %v1770
        %v1849 = vpack.c.bf16 %v1771, %v1771
        %v1850 = vpack.c.bf16 %v1772, %v1772
        %v1851 = vpack.c.bf16 %v1773, %v1773
        %v1852 = vpack.c.bf16 %v1774, %v1774
        %v1853 = vpack.c.bf16 %v1775, %v1775
        %v1854 = vpack.c.bf16 %v1776, %v1776
        %v1855 = vpack.c.bf16 %v1777, %v1777
        %v1856 = vpack.c.bf16 %v1778, %v1778
        %v1857 = vpack.c.bf16 %v1779, %v1779
        %v1858 = vpack.c.bf16 %v1780, %v1780
        %v1859 = vpack.c.bf16 %v1781, %v1781
        %v1860 = vpack.c.bf16 %v1782, %v1782
        %v1861 = vpack.c.bf16 %v1783, %v1783
        %v1862 = vpack.c.bf16 %v1784, %v1784
        %v1863 = vpack.c.bf16 %v1785, %v1785
        %v1864 = vpack.c.bf16 %v1786, %v1786
        %v1865 = vpack.c.bf16 %v1787, %v1787
        %v1866 = vpack.c.bf16 %v1788, %v1788
        %v1867 = vunpack.c.l.bf16 %v1803
        %v1868 = vunpack.c.l.bf16 %v1804
        %v1869 = vunpack.c.l.bf16 %v1805
        %v1870 = vunpack.c.l.bf16 %v1806
        %v1871 = vunpack.c.l.bf16 %v1807
        %v1872 = vunpack.c.l.bf16 %v1808
        %v1873 = vunpack.c.l.bf16 %v1809
        %v1874 = vunpack.c.l.bf16 %v1810
        %v1875 = vunpack.c.l.bf16 %v1811
        %v1876 = vunpack.c.l.bf16 %v1812
        %v1877 = vunpack.c.l.bf16 %v1813
        %v1878 = vunpack.c.l.bf16 %v1814
        %v1879 = vunpack.c.l.bf16 %v1815
        %v1880 = vunpack.c.l.bf16 %v1816
        %v1881 = vunpack.c.l.bf16 %v1817
        %v1882 = vunpack.c.l.bf16 %v1818
        %v1883 = vunpack.c.l.bf16 %v1819
        %v1884 = vunpack.c.l.bf16 %v1820
        %v1885 = vunpack.c.l.bf16 %v1821
        %v1886 = vunpack.c.l.bf16 %v1822
        %v1887 = vunpack.c.l.bf16 %v1823
        %v1888 = vunpack.c.l.bf16 %v1824
        %v1889 = vunpack.c.l.bf16 %v1825
        %v1890 = vunpack.c.l.bf16 %v1826
        %v1891 = vunpack.c.l.bf16 %v1827
        %v1892 = vunpack.c.l.bf16 %v1828
        %v1893 = vunpack.c.l.bf16 %v1829
        %v1894 = vunpack.c.l.bf16 %v1830
        %v1895 = vunpack.c.l.bf16 %v1831
        %v1896 = vunpack.c.l.bf16 %v1832
        %v1897 = vunpack.c.l.bf16 %v1833
        %v1898 = vunpack.c.l.bf16 %v1834
        %v1899 = vunpack.c.l.bf16 %v1835
        %v1900 = vunpack.c.l.bf16 %v1836
        %v1901 = vunpack.c.l.bf16 %v1837
        %v1902 = vunpack.c.l.bf16 %v1838
        %v1903 = vunpack.c.l.bf16 %v1839
        %v1904 = vunpack.c.l.bf16 %v1840
        %v1905 = vunpack.c.l.bf16 %v1841
        %v1906 = vunpack.c.l.bf16 %v1842
        %v1907 = vunpack.c.l.bf16 %v1843
        %v1908 = vunpack.c.l.bf16 %v1844
        %v1909 = vunpack.c.l.bf16 %v1845
        %v1910 = vunpack.c.l.bf16 %v1846
        %v1911 = vunpack.c.l.bf16 %v1847
        %v1912 = vunpack.c.l.bf16 %v1848
        %v1913 = vunpack.c.l.bf16 %v1849
        %v1914 = vunpack.c.l.bf16 %v1850
        %v1915 = vunpack.c.l.bf16 %v1851
        %v1916 = vunpack.c.l.bf16 %v1852
        %v1917 = vunpack.c.l.bf16 %v1853
        %v1918 = vunpack.c.l.bf16 %v1854
        %v1919 = vunpack.c.l.bf16 %v1855
        %v1920 = vunpack.c.l.bf16 %v1856
        %v1921 = vunpack.c.l.bf16 %v1857
        %v1922 = vunpack.c.l.bf16 %v1858
        %v1923 = vunpack.c.l.bf16 %v1859
        %v1924 = vunpack.c.l.bf16 %v1860
        %v1925 = vunpack.c.l.bf16 %v1861
        %v1926 = vunpack.c.l.bf16 %v1862
        %v1927 = vunpack.c.l.bf16 %v1863
        %v1928 = vunpack.c.l.bf16 %v1864
        %v1929 = vunpack.c.l.bf16 %v1865
        %v1930 = vunpack.c.l.bf16 %v1866
        %v1931 = vsub.f32 %v1725, %v1867
        %v1932 = vsub.f32 %v1726, %v1868
        %v1933 = vsub.f32 %v1727, %v1869
        %v1934 = vsub.f32 %v1728, %v1870
        %v1935 = vsub.f32 %v1729, %v1871
        %v1936 = vsub.f32 %v1730, %v1872
        %v1937 = vsub.f32 %v1731, %v1873
        %v1938 = vsub.f32 %v1732, %v1874
        %v1939 = vsub.f32 %v1733, %v1875
        %v1940 = vsub.f32 %v1734, %v1876
        %v1941 = vsub.f32 %v1735, %v1877
        %v1942 = vsub.f32 %v1736, %v1878
        %v1943 = vsub.f32 %v1737, %v1879
        %v1944 = vsub.f32 %v1738, %v1880
        %v1945 = vsub.f32 %v1739, %v1881
        %v1946 = vsub.f32 %v1740, %v1882
        %v1947 = vsub.f32 %v1741, %v1883
        %v1948 = vsub.f32 %v1742, %v1884
        %v1949 = vsub.f32 %v1743, %v1885
        %v1950 = vsub.f32 %v1744, %v1886
        %v1951 = vsub.f32 %v1745, %v1887
        %v1952 = vsub.f32 %v1746, %v1888
        %v1953 = vsub.f32 %v1747, %v1889
        %v1954 = vsub.f32 %v1748, %v1890
        %v1955 = vsub.f32 %v1749, %v1891
        %v1956 = vsub.f32 %v1750, %v1892
        %v1957 = vsub.f32 %v1751, %v1893
        %v1958 = vsub.f32 %v1752, %v1894
        %v1959 = vsub.f32 %v1753, %v1895
        %v1960 = vsub.f32 %v1754, %v1896
        %v1961 = vsub.f32 %v1755, %v1897
        %v1962 = vsub.f32 %v1756, %v1898
        %v1963 = vsub.f32 %v1757, %v1899
        %v1964 = vsub.f32 %v1758, %v1900
        %v1965 = vsub.f32 %v1759, %v1901
        %v1966 = vsub.f32 %v1760, %v1902
        %v1967 = vsub.f32 %v1761, %v1903
        %v1968 = vsub.f32 %v1762, %v1904
        %v1969 = vsub.f32 %v1763, %v1905
        %v1970 = vsub.f32 %v1764, %v1906
        %v1971 = vsub.f32 %v1765, %v1907
        %v1972 = vsub.f32 %v1766, %v1908
        %v1973 = vsub.f32 %v1767, %v1909
        %v1974 = vsub.f32 %v1768, %v1910
        %v1975 = vsub.f32 %v1769, %v1911
        %v1976 = vsub.f32 %v1770, %v1912
        %v1977 = vsub.f32 %v1771, %v1913
        %v1978 = vsub.f32 %v1772, %v1914
        %v1979 = vsub.f32 %v1773, %v1915
        %v1980 = vsub.f32 %v1774, %v1916
        %v1981 = vsub.f32 %v1775, %v1917
        %v1982 = vsub.f32 %v1776, %v1918
        %v1983 = vsub.f32 %v1777, %v1919
        %v1984 = vsub.f32 %v1778, %v1920
        %v1985 = vsub.f32 %v1779, %v1921
        %v1986 = vsub.f32 %v1780, %v1922
        %v1987 = vsub.f32 %v1781, %v1923
        %v1988 = vsub.f32 %v1782, %v1924
        %v1989 = vsub.f32 %v1783, %v1925
        %v1990 = vsub.f32 %v1784, %v1926
        %v1991 = vsub.f32 %v1785, %v1927
        %v1992 = vsub.f32 %v1786, %v1928
        %v1993 = vsub.f32 %v1787, %v1929
        %v1994 = vsub.f32 %v1788, %v1930
        %v1995 = vpack.c.bf16 %v1932, %v1931
        %v1996 = vpack.c.bf16 %v1934, %v1933
        %v1997 = vpack.c.bf16 %v1936, %v1935
        %v1998 = vpack.c.bf16 %v1938, %v1937
        %v1999 = vpack.c.bf16 %v1940, %v1939
        %v2000 = vpack.c.bf16 %v1942, %v1941
        %v2001 = vpack.c.bf16 %v1944, %v1943
        %v2002 = vpack.c.bf16 %v1946, %v1945
        %v2003 = vpack.c.bf16 %v1948, %v1947
        %v2004 = vpack.c.bf16 %v1950, %v1949
        %v2005 = vpack.c.bf16 %v1952, %v1951
        %v2006 = vpack.c.bf16 %v1954, %v1953
        %v2007 = vpack.c.bf16 %v1956, %v1955
        %v2008 = vpack.c.bf16 %v1958, %v1957
        %v2009 = vpack.c.bf16 %v1960, %v1959
        %v2010 = vpack.c.bf16 %v1962, %v1961
        %v2011 = vpack.c.bf16 %v1964, %v1963
        %v2012 = vpack.c.bf16 %v1966, %v1965
        %v2013 = vpack.c.bf16 %v1968, %v1967
        %v2014 = vpack.c.bf16 %v1970, %v1969
        %v2015 = vpack.c.bf16 %v1972, %v1971
        %v2016 = vpack.c.bf16 %v1974, %v1973
        %v2017 = vpack.c.bf16 %v1976, %v1975
        %v2018 = vpack.c.bf16 %v1978, %v1977
        %v2019 = vpack.c.bf16 %v1980, %v1979
        %v2020 = vpack.c.bf16 %v1982, %v1981
        %v2021 = vpack.c.bf16 %v1984, %v1983
        %v2022 = vpack.c.bf16 %v1986, %v1985
        %v2023 = vpack.c.bf16 %v1988, %v1987
        %v2024 = vpack.c.bf16 %v1990, %v1989
        %v2025 = vpack.c.bf16 %v1992, %v1991
        %v2026 = vpack.c.bf16 %v1994, %v1993
        %v2029 = vunpack.c.l.b16 %v1789
        %v2030 = vunpack.c.h.b16 %v1789
        %v2031 = vunpack.c.l.b16 %v1790
        %v2032 = vunpack.c.h.b16 %v1790
        %v2033 = vpack.c.b16 %v2029, %v2029
        %v2034 = vpack.c.b16 %v2030, %v2030
        %v2035 = vpack.c.b16 %v2031, %v2031
        %v2036 = vpack.c.b16 %v2032, %v2032
        %2041 = vmatpush.bf16.msra.mxu0 %v2002
        %2042 = vmatpush.bf16.msra.mxu0 %v2001
        %2043 = vmatpush.bf16.msra.mxu0 %v2000
        %2044 = vmatpush.bf16.msra.mxu0 %v1999
        %2045 = vmatpush.bf16.msra.mxu0 %v1998
        %2046 = vmatpush.bf16.msra.mxu0 %v1997
        %2047 = vmatpush.bf16.msra.mxu0 %v1996
        %2048 = vmatpush.bf16.msra.mxu0 %v1995
        %2049 = vmatmul.bf16.gmra.mxu0 %v2033
        %v2050 = vpop.f32.mrf.mxu0
        %v2051 = vadd.f32 0.0, %v2050
        %v2052 = vpop.f32.mrf.mxu0
        %2053 = vdwg.mxu0
        %2054 = vmatpush.bf16.msra.mxu0 %v2010
        %2055 = vmatpush.bf16.msra.mxu0 %v2009
        %2056 = vmatpush.bf16.msra.mxu0 %v2008
        %2057 = vmatpush.bf16.msra.mxu0 %v2007
        %2058 = vmatpush.bf16.msra.mxu0 %v2006
        %2059 = vmatpush.bf16.msra.mxu0 %v2005
        %2060 = vmatpush.bf16.msra.mxu0 %v2004
        %2061 = vmatpush.bf16.msra.mxu0 %v2003
        %2062 = vmatmul.bf16.gmra.mxu0 %v2034
        %v2063 = vpop.f32.mrf.mxu0
        %v2064 = vadd.f32 %v2051, %v2063
        %v2065 = vpop.f32.mrf.mxu0
        %2066 = vdwg.mxu0
        %2067 = vmatpush.bf16.msra.mxu0 %v2018
        %2068 = vmatpush.bf16.msra.mxu0 %v2017
        %2069 = vmatpush.bf16.msra.mxu0 %v2016
        %2070 = vmatpush.bf16.msra.mxu0 %v2015
        %2071 = vmatpush.bf16.msra.mxu0 %v2014
        %2072 = vmatpush.bf16.msra.mxu0 %v2013
        %2073 = vmatpush.bf16.msra.mxu0 %v2012
        %2074 = vmatpush.bf16.msra.mxu0 %v2011
        %2075 = vmatmul.bf16.gmra.mxu0 %v2035
        %v2076 = vpop.f32.mrf.mxu0
        %v2077 = vadd.f32 %v2064, %v2076
        %v2078 = vpop.f32.mrf.mxu0
        %2079 = vdwg.mxu0
        %2080 = vmatpush.bf16.msra.mxu0 %v2026
        %2081 = vmatpush.bf16.msra.mxu0 %v2025
        %2082 = vmatpush.bf16.msra.mxu0 %v2024
        %2083 = vmatpush.bf16.msra.mxu0 %v2023
        %2084 = vmatpush.bf16.msra.mxu0 %v2022
        %2085 = vmatpush.bf16.msra.mxu0 %v2021
        %2086 = vmatpush.bf16.msra.mxu0 %v2020
        %2087 = vmatpush.bf16.msra.mxu0 %v2019
        %2088 = vmatmul.bf16.gmra.mxu0 %v2036
        %v2089 = vpop.f32.mrf.mxu0
        %v2090 = vadd.f32 %v2077, %v2089
        %v2091 = vpop.f32.mrf.mxu0
        %2092 = vdwg.mxu0
        %v2157 = vunpack.c.l.b16 %v1803
        %v2158 = vunpack.c.l.b16 %v1804
        %v2159 = vunpack.c.l.b16 %v1805
        %v2160 = vunpack.c.l.b16 %v1806
        %v2161 = vunpack.c.l.b16 %v1807
        %v2162 = vunpack.c.l.b16 %v1808
        %v2163 = vunpack.c.l.b16 %v1809
        %v2164 = vunpack.c.l.b16 %v1810
        %v2165 = vunpack.c.l.b16 %v1811
        %v2166 = vunpack.c.l.b16 %v1812
        %v2167 = vunpack.c.l.b16 %v1813
        %v2168 = vunpack.c.l.b16 %v1814
        %v2169 = vunpack.c.l.b16 %v1815
        %v2170 = vunpack.c.l.b16 %v1816
        %v2171 = vunpack.c.l.b16 %v1817
        %v2172 = vunpack.c.l.b16 %v1818
        %v2173 = vunpack.c.l.b16 %v1819
        %v2174 = vunpack.c.l.b16 %v1820
        %v2175 = vunpack.c.l.b16 %v1821
        %v2176 = vunpack.c.l.b16 %v1822
        %v2177 = vunpack.c.l.b16 %v1823
        %v2178 = vunpack.c.l.b16 %v1824
        %v2179 = vunpack.c.l.b16 %v1825
        %v2180 = vunpack.c.l.b16 %v1826
        %v2181 = vunpack.c.l.b16 %v1827
        %v2182 = vunpack.c.l.b16 %v1828
        %v2183 = vunpack.c.l.b16 %v1829
        %v2184 = vunpack.c.l.b16 %v1830
        %v2185 = vunpack.c.l.b16 %v1831
        %v2186 = vunpack.c.l.b16 %v1832
        %v2187 = vunpack.c.l.b16 %v1833
        %v2188 = vunpack.c.l.b16 %v1834
        %v2189 = vunpack.c.l.b16 %v1835
        %v2190 = vunpack.c.l.b16 %v1836
        %v2191 = vunpack.c.l.b16 %v1837
        %v2192 = vunpack.c.l.b16 %v1838
        %v2193 = vunpack.c.l.b16 %v1839
        %v2194 = vunpack.c.l.b16 %v1840
        %v2195 = vunpack.c.l.b16 %v1841
        %v2196 = vunpack.c.l.b16 %v1842
        %v2197 = vunpack.c.l.b16 %v1843
        %v2198 = vunpack.c.l.b16 %v1844
        %v2199 = vunpack.c.l.b16 %v1845
        %v2200 = vunpack.c.l.b16 %v1846
        %v2201 = vunpack.c.l.b16 %v1847
        %v2202 = vunpack.c.l.b16 %v1848
        %v2203 = vunpack.c.l.b16 %v1849
        %v2204 = vunpack.c.l.b16 %v1850
        %v2205 = vunpack.c.l.b16 %v1851
        %v2206 = vunpack.c.l.b16 %v1852
        %v2207 = vunpack.c.l.b16 %v1853
        %v2208 = vunpack.c.l.b16 %v1854
        %v2209 = vunpack.c.l.b16 %v1855
        %v2210 = vunpack.c.l.b16 %v1856
        %v2211 = vunpack.c.l.b16 %v1857
        %v2212 = vunpack.c.l.b16 %v1858
        %v2213 = vunpack.c.l.b16 %v1859
        %v2214 = vunpack.c.l.b16 %v1860
        %v2215 = vunpack.c.l.b16 %v1861
        %v2216 = vunpack.c.l.b16 %v1862
        %v2217 = vunpack.c.l.b16 %v1863
        %v2218 = vunpack.c.l.b16 %v1864
        %v2219 = vunpack.c.l.b16 %v1865
        %v2220 = vunpack.c.l.b16 %v1866
        %v2221 = vpack.c.b16 %v2158, %v2157
        %v2222 = vpack.c.b16 %v2160, %v2159
        %v2223 = vpack.c.b16 %v2162, %v2161
        %v2224 = vpack.c.b16 %v2164, %v2163
        %v2225 = vpack.c.b16 %v2166, %v2165
        %v2226 = vpack.c.b16 %v2168, %v2167
        %v2227 = vpack.c.b16 %v2170, %v2169
        %v2228 = vpack.c.b16 %v2172, %v2171
        %v2229 = vpack.c.b16 %v2174, %v2173
        %v2230 = vpack.c.b16 %v2176, %v2175
        %v2231 = vpack.c.b16 %v2178, %v2177
        %v2232 = vpack.c.b16 %v2180, %v2179
        %v2233 = vpack.c.b16 %v2182, %v2181
        %v2234 = vpack.c.b16 %v2184, %v2183
        %v2235 = vpack.c.b16 %v2186, %v2185
        %v2236 = vpack.c.b16 %v2188, %v2187
        %v2237 = vpack.c.b16 %v2190, %v2189
        %v2238 = vpack.c.b16 %v2192, %v2191
        %v2239 = vpack.c.b16 %v2194, %v2193
        %v2240 = vpack.c.b16 %v2196, %v2195
        %v2241 = vpack.c.b16 %v2198, %v2197
        %v2242 = vpack.c.b16 %v2200, %v2199
        %v2243 = vpack.c.b16 %v2202, %v2201
        %v2244 = vpack.c.b16 %v2204, %v2203
        %v2245 = vpack.c.b16 %v2206, %v2205
        %v2246 = vpack.c.b16 %v2208, %v2207
        %v2247 = vpack.c.b16 %v2210, %v2209
        %v2248 = vpack.c.b16 %v2212, %v2211
        %v2249 = vpack.c.b16 %v2214, %v2213
        %v2250 = vpack.c.b16 %v2216, %v2215
        %v2251 = vpack.c.b16 %v2218, %v2217
        %v2252 = vpack.c.b16 %v2220, %v2219
        %2285 = vmatpush.bf16.msra.mxu0 %v2228
        %2286 = vmatpush.bf16.msra.mxu0 %v2227
        %2287 = vmatpush.bf16.msra.mxu0 %v2226
        %2288 = vmatpush.bf16.msra.mxu0 %v2225
        %2289 = vmatpush.bf16.msra.mxu0 %v2224
        %2290 = vmatpush.bf16.msra.mxu0 %v2223
        %2291 = vmatpush.bf16.msra.mxu0 %v2222
        %2292 = vmatpush.bf16.msra.mxu0 %v2221
        %2293 = vmatmul.bf16.gmra.mxu0 %v2033
        %v2294 = vpop.f32.mrf.mxu0
        %v2295 = vadd.f32 %v2090, %v2294
        %v2296 = vpop.f32.mrf.mxu0
        %2297 = vdwg.mxu0
        %2298 = vmatpush.bf16.msra.mxu0 %v2236
        %2299 = vmatpush.bf16.msra.mxu0 %v2235
        %2300 = vmatpush.bf16.msra.mxu0 %v2234
        %2301 = vmatpush.bf16.msra.mxu0 %v2233
        %2302 = vmatpush.bf16.msra.mxu0 %v2232
        %2303 = vmatpush.bf16.msra.mxu0 %v2231
        %2304 = vmatpush.bf16.msra.mxu0 %v2230
        %2305 = vmatpush.bf16.msra.mxu0 %v2229
        %2306 = vmatmul.bf16.gmra.mxu0 %v2034
        %v2307 = vpop.f32.mrf.mxu0
        %v2308 = vadd.f32 %v2295, %v2307
        %v2309 = vpop.f32.mrf.mxu0
        %2310 = vdwg.mxu0
        %2311 = vmatpush.bf16.msra.mxu0 %v2244
        %2312 = vmatpush.bf16.msra.mxu0 %v2243
        %2313 = vmatpush.bf16.msra.mxu0 %v2242
        %2314 = vmatpush.bf16.msra.mxu0 %v2241
        %2315 = vmatpush.bf16.msra.mxu0 %v2240
        %2316 = vmatpush.bf16.msra.mxu0 %v2239
        %2317 = vmatpush.bf16.msra.mxu0 %v2238
        %2318 = vmatpush.bf16.msra.mxu0 %v2237
        %2319 = vmatmul.bf16.gmra.mxu0 %v2035
        %v2320 = vpop.f32.mrf.mxu0
        %v2321 = vadd.f32 %v2308, %v2320
        %v2322 = vpop.f32.mrf.mxu0
        %2323 = vdwg.mxu0
        %2324 = vmatpush.bf16.msra.mxu0 %v2252
        %2325 = vmatpush.bf16.msra.mxu0 %v2251
        %2326 = vmatpush.bf16.msra.mxu0 %v2250
        %2327 = vmatpush.bf16.msra.mxu0 %v2249
        %2328 = vmatpush.bf16.msra.mxu0 %v2248
        %2329 = vmatpush.bf16.msra.mxu0 %v2247
        %2330 = vmatpush.bf16.msra.mxu0 %v2246
        %2331 = vmatpush.bf16.msra.mxu0 %v2245
        %2332 = vmatmul.bf16.gmra.mxu0 %v2036
        %v2333 = vpop.f32.mrf.mxu0
        %v2334 = vadd.f32 %v2321, %v2333
        %v2335 = vpop.f32.mrf.mxu0
        %2336 = vdwg.mxu0
        %2337 = vmatpush.bf16.msra.mxu0 %v2228
        %2338 = vmatpush.bf16.msra.mxu0 %v2227
        %2339 = vmatpush.bf16.msra.mxu0 %v2226
        %2340 = vmatpush.bf16.msra.mxu0 %v2225
        %2341 = vmatpush.bf16.msra.mxu0 %v2224
        %2342 = vmatpush.bf16.msra.mxu0 %v2223
        %2343 = vmatpush.bf16.msra.mxu0 %v2222
        %2344 = vmatpush.bf16.msra.mxu0 %v2221
        %2345 = vmatmul.bf16.gmra.mxu0 %v1799
        %v2346 = vpop.f32.mrf.mxu0
        %v2347 = vadd.f32 0.0, %v2346
        %v2348 = vpop.f32.mrf.mxu0
        %2349 = vdwg.mxu0
        %2350 = vmatpush.bf16.msra.mxu0 %v2236
        %2351 = vmatpush.bf16.msra.mxu0 %v2235
        %2352 = vmatpush.bf16.msra.mxu0 %v2234
        %2353 = vmatpush.bf16.msra.mxu0 %v2233
        %2354 = vmatpush.bf16.msra.mxu0 %v2232
        %2355 = vmatpush.bf16.msra.mxu0 %v2231
        %2356 = vmatpush.bf16.msra.mxu0 %v2230
        %2357 = vmatpush.bf16.msra.mxu0 %v2229
        %2358 = vmatmul.bf16.gmra.mxu0 %v1800
        %v2359 = vpop.f32.mrf.mxu0
        %v2360 = vadd.f32 %v2347, %v2359
        %v2361 = vpop.f32.mrf.mxu0
        %2362 = vdwg.mxu0
        %2363 = vmatpush.bf16.msra.mxu0 %v2244
        %2364 = vmatpush.bf16.msra.mxu0 %v2243
        %2365 = vmatpush.bf16.msra.mxu0 %v2242
        %2366 = vmatpush.bf16.msra.mxu0 %v2241
        %2367 = vmatpush.bf16.msra.mxu0 %v2240
        %2368 = vmatpush.bf16.msra.mxu0 %v2239
        %2369 = vmatpush.bf16.msra.mxu0 %v2238
        %2370 = vmatpush.bf16.msra.mxu0 %v2237
        %2371 = vmatmul.bf16.gmra.mxu0 %v1801
        %v2372 = vpop.f32.mrf.mxu0
        %v2373 = vadd.f32 %v2360, %v2372
        %v2374 = vpop.f32.mrf.mxu0
        %2375 = vdwg.mxu0
        %2376 = vmatpush.bf16.msra.mxu0 %v2252
        %2377 = vmatpush.bf16.msra.mxu0 %v2251
        %2378 = vmatpush.bf16.msra.mxu0 %v2250
        %2379 = vmatpush.bf16.msra.mxu0 %v2249
        %2380 = vmatpush.bf16.msra.mxu0 %v2248
        %2381 = vmatpush.bf16.msra.mxu0 %v2247
        %2382 = vmatpush.bf16.msra.mxu0 %v2246
        %2383 = vmatpush.bf16.msra.mxu0 %v2245
        %2384 = vmatmul.bf16.gmra.mxu0 %v1802
        %v2385 = vpop.f32.mrf.mxu0
        %v2386 = vadd.f32 %v2373, %v2385
        %v2387 = vpop.f32.mrf.mxu0
        %2388 = vdwg.mxu0
        %v2389 = vadd.f32 %v2334, %v2386
        %v2390 = vld [vmem:[%s7] sm:$0x1]
        %v2392 = vperm.slane %v2390, 0
        %v2394 = vadd.f32 %v2389, %v2392
        %v2395 = vadd.f32 %v2394, %v1126
        %2396 = vadd.xlane.f32.xlu0 %v2395
        %v2397 = vpop.xlane.xlu0 %2396
        %v2398 = vmul.f32 %v2397, %v1105
        %v2399 = vsub.f32 %v2395, %v2398
        %v2400 = vmul.f32 %v2399, %v2399
        %2401 = vadd.xlane.f32.xlu0 %v2400
        %v2402 = vpop.xlane.xlu0 %2401
        %v2403 = vmul.f32 %v2402, 0.007874016
        %v2404 = vrcp.pop %v2403
        %v2405 = vmul.f32 %v2403, %v2404
        %v2406 = vsub.f32 1.0, %v2405
        %v2407 = vmul.f32 %v2404, %v2406
        %v2408 = vadd.f32 %v2404, %v2407
        %vm2409 = vweird.f32 %v2403
        %vm2410 = vweird.f32 %v2404
        %vm2411 = vmor %vm2409, %vm2410
        %v2412 = vsel %vm2411, %v2404, %v2408
        %v2413 = vand.u32 2147483647, %v2403
        %vm2414 = vcmp.eq.f32.partialorder %v2413, 8.507059e+37
        %v2415 = vand.u32 %v2403, 2147483648
        %v2416 = vor.u32 1.1754944e-38, %v2415
        %v2417 = vsel %vm2414, %v2416, %v2412
        %v2418 = vmul.f32 %v2399, %v2417
        %2419 = vst [vmem:[%s346] sm:$0xff] %v2418
        %s2420 = sand.u32 %s205, 1
        %s2421 = scalar_lea.sflag [#allocation4], %s2420
        %s2422 = sand.u32 %s205, 1
        %s2423 = smul.addr %s2422, 8
        %s2424 = scalar_lea.vmem [#allocation8], %s2423
        // Predicated region
        $region65: #{model_forward.1} parent=51 // pred_check
          %p2425 = pneg %p215
        $region66: #{model_forward.1} parent=51 // pred_check_branch
          %2427 = sbr.rel (%p2425) target = $region68
        $region67: #{model_forward.1} parent=51 // pred_region
          %2429 = vsyncadd %s2421, 0
          %s2430 = smul.addr %s24, 8
          %s2431 = scalar_lea.hbm %s8, %s2430
          %s2433 = sshll.u32 %s2424, 4
          %s2434 = int_to_ptr.vmem [resolvable:$true] %s2433
          %s2435 = sshll.u32 %s2431, 4
          %s2436 = int_to_ptr.hbm [resolvable:$true] %s2435
          %2438 = dma.vmem_to_hbm [thread:$0]  %s2434, 128, %s2436, %s2421
        $region68: #{model_forward.1} parent=51 // pred_fallthru
          _
      $region52: #{model_forward.1} parent=5 // pred_fallthru
        _
      %p2439 = scmp.le.s32.totalorder 2, %s19
      // Predicated region
      $region69: #{model_forward.1} parent=5 // pred_check
        %p2440 = pneg %p2439
      $region70: #{model_forward.1} parent=5 // pred_check_branch
        %2442 = sbr.rel (%p2440) target = $region72
      $region71: #{model_forward.1} parent=5 // pred_region
        %s2443 = ssub.s32 %s19, 2
        // Predicated region
        $region73: #{model_forward.1} parent=71 // pred_check
          %p2444 = pneg %p221
        $region74: #{model_forward.1} parent=71 // pred_check_branch
          %2446 = sbr.rel (%p2444) target = $region76
        $region75: #{model_forward.1} parent=71 // pred_region
          %s2447 = sand.u32 %s206, 1
          %s2448 = scalar_lea.sflag [#allocation4], %s2447
          %s2449 = sand.u32 %s206, 1
          %s2450 = smul.addr %s2449, 8
          %s2451 = scalar_lea.vmem [#allocation8], %s2450
          %2453 = dma.done %s2448, 128
        $region76: #{model_forward.1} parent=71 // pred_fallthru
          _
      $region72: #{model_forward.1} parent=5 // pred_fallthru
        _
    $region6: #{model_forward.1} parent=1 // loop_footer
      %s23 = sadd.s32 1, %s19
    $region7: #{model_forward.1} parent=1 // loop_footer_branch
      %18 = sbr.rel target = $region3
    $region8: #{model_forward.1} parent=1 // loop_exit
      _
    %2454 = vsyncpa [#allocation3], 1
    %s2455 = scalar_lea.sflag [#allocation3], 1
    %2456 = vsyncpa %s2455, 1
    %2457 = vsyncpa [#allocation6], 1
    %2458 = vsyncpa [#allocation4], 1
    %s2459 = scalar_lea.sflag [#allocation4], 1
    %2460 = vsyncpa %s2459, 1

</llo_original>
